<compile_context>
chip_gen: v7x
topology: tpu7x:2x2x1
jax: 0.10.0
libtpu: 0.0.40
codegen_flags: <defaults>
</compile_context>

<pallas_src>
import functools

import jax
import jax.numpy as jnp
from jax.experimental import pallas as pl
from jax.experimental.pallas import tpu as pltpu

LEAKY_SLOPE = 0.1
IN_FEATURES = 1000
HIDDEN = 512
OUT_FEATURES = 256


def _round_up(x, m):
    return (x + m - 1) // m * m


def _choose_tm(b, tm):
    """Pick the M tile: big tiles for big batches, >=2 blocks for v7x megacore."""
    m8 = _round_up(max(b, 1), 8)
    if m8 <= 8:
        return 8
    if m8 <= 2 * tm:
        # Split into (at least) two blocks so both v7x TensorCores get work.
        return _round_up(-(-m8 // 2), 8)
    return tm


# ----------------------------------------------------------------------------
# Fused kernel: out = (leaky_relu(x @ W1 + b1)) @ W2 + b2
#   - x arrives f32, cast to bf16 in-kernel (no wrapper pad/cast pass).
#   - both matmuls on the MXU with f32 accumulation.
#   - the 512-wide intermediate never touches HBM.
# ----------------------------------------------------------------------------
def _resnet_fc_kernel(x_ref, w1_ref, b1_ref, w2_ref, b2_ref, o_ref):
    x = x_ref[...].astype(jnp.bfloat16)
    h = jnp.dot(x, w1_ref[...], preferred_element_type=jnp.float32)
    h = h + b1_ref[...]
    h = jnp.maximum(h, LEAKY_SLOPE * h)          # LeakyReLU(0.1), slope < 1
    out = jnp.dot(h.astype(jnp.bfloat16), w2_ref[...],
                  preferred_element_type=jnp.float32)
    out = out + b2_ref[...]
    o_ref[...] = out.astype(o_ref.dtype)


def resnet_fc(resnet_output, params, *, tm=512, out_dtype=jnp.bfloat16):
    """Fused ResnetFC forward.  Accepts any (B, ...) input (nn.Flatten)."""
    b = resnet_output.shape[0]
    x = resnet_output.reshape(b, -1)                     # nn.Flatten
    k = x.shape[1]
    assert k == IN_FEATURES, f"expected {IN_FEATURES} input features, got {k}"

    tm_eff = _choose_tm(b, tm)
    grid_m = pl.cdiv(b, tm_eff)

    w1, b1 = params["w1"], params["b1"]                  # (1000, 512) bf16, (1, 512) f32
    w2, b2 = params["w2"], params["b2"]                  # (512, 256) bf16, (1, 256) f32

    out_bytes = jnp.dtype(out_dtype).itemsize
    cost = pl.CostEstimate(
        flops=2 * b * (IN_FEATURES * HIDDEN + HIDDEN * OUT_FEATURES),
        transcendentals=0,
        bytes_accessed=(x.size * x.dtype.itemsize
                        + w1.size * 2 + w2.size * 2
                        + b1.size * 4 + b2.size * 4
                        + b * OUT_FEATURES * out_bytes),
    )

    out = pl.pallas_call(
        _resnet_fc_kernel,
        out_shape=jax.ShapeDtypeStruct((b, OUT_FEATURES), out_dtype),
        grid_spec=pltpu.PrefetchScalarGridSpec(
            num_scalar_prefetch=0,
            grid=(grid_m,),
            in_specs=[
                pl.BlockSpec((tm_eff, IN_FEATURES), lambda i: (i, 0)),        # x tile (f32)
                pl.BlockSpec((IN_FEATURES, HIDDEN), lambda i: (0, 0)),        # W1 (resident)
                pl.BlockSpec((1, HIDDEN), lambda i: (0, 0)),                  # b1
                pl.BlockSpec((HIDDEN, OUT_FEATURES), lambda i: (0, 0)),       # W2 (resident)
                pl.BlockSpec((1, OUT_FEATURES), lambda i: (0, 0)),            # b2
            ],
            out_specs=pl.BlockSpec((tm_eff, OUT_FEATURES), lambda i: (i, 0)),
        ),
        compiler_params=pltpu.CompilerParams(
            dimension_semantics=("parallel",),
            vmem_limit_bytes=32 * 1024 * 1024,
        ),
        cost_estimate=cost,
    )(x, w1, b1, w2, b2)

    return out


# ----------------------------------------------------------------------------
# Parameters (PyTorch nn.Linear default uniform init), stored MXU-friendly:
#   W pre-transposed to (in, out) bf16; bias pre-shaped (1, out) f32.
# ----------------------------------------------------------------------------
def make_params(key):
    k1w, k1b, k2w, k2b = jax.random.split(key, 4)
    bound1 = 1.0 / jnp.sqrt(jnp.float32(IN_FEATURES))
    bound2 = 1.0 / jnp.sqrt(jnp.float32(HIDDEN))
    w1 = jax.random.uniform(k1w, (IN_FEATURES, HIDDEN), jnp.float32, -bound1, bound1)
    b1 = jax.random.uniform(k1b, (HIDDEN,), jnp.float32, -bound1, bound1)
    w2 = jax.random.uniform(k2w, (HIDDEN, OUT_FEATURES), jnp.float32, -bound2, bound2)
    b2 = jax.random.uniform(k2b, (OUT_FEATURES,), jnp.float32, -bound2, bound2)
    return {
        "w1": w1.astype(jnp.bfloat16),
        "b1": b1.reshape(1, HIDDEN),
        "w2": w2.astype(jnp.bfloat16),
        "b2": b2.reshape(1, OUT_FEATURES),
    }


def resnet_fc_ref(resnet_output, params, out_dtype=jnp.bfloat16):
    """Pure-JAX reference mirroring the kernel's bf16/f32 numerics."""
    b = resnet_output.shape[0]
    x = resnet_output.reshape(b, -1).astype(jnp.bfloat16)
    h = jnp.dot(x, params["w1"], preferred_element_type=jnp.float32) + params["b1"]
    h = jnp.maximum(h, LEAKY_SLOPE * h)
    out = jnp.dot(h.astype(jnp.bfloat16), params["w2"],
                  preferred_element_type=jnp.float32) + params["b2"]
    return out.astype(out_dtype)


# ----------------------------------------------------------------------------
if __name__ == "__main__":
    key = jax.random.PRNGKey(0)
    k_params, k_x = jax.random.split(key)

    params = make_params(k_params)

    # Small example consistent with the module: batch=2 resnet outputs (2, 1000).
    resnet_output = jax.random.normal(k_x, (2, IN_FEATURES), jnp.float32)

    fwd = jax.jit(functools.partial(resnet_fc, params=params))
    out = fwd(resnet_output)
    jax.block_until_ready(out)

    ref = resnet_fc_ref(resnet_output, params)

    assert out.shape == (2, OUT_FEATURES), out.shape
    out_f32 = out.astype(jnp.float32)
    ref_f32 = ref.astype(jnp.float32)
    assert jnp.all(jnp.isfinite(out_f32))
    assert jnp.allclose(out_f32, ref_f32, atol=2e-2, rtol=2e-2), (
        float(jnp.max(jnp.abs(out_f32 - ref_f32))))

    print("KERNEL_OK")
</pallas_src>

<mosaic_0001>
module attributes {stable_mosaic.version = 11 : i64} {
  func.func @_resnet_fc_kernel(%arg0: i32, %arg1: memref<8x1000xf32, #tpu.memory_space<vmem>>, %arg2: memref<1000x512xbf16, #tpu.memory_space<vmem>>, %arg3: memref<1x512xf32, #tpu.memory_space<vmem>>, %arg4: memref<512x256xbf16, #tpu.memory_space<vmem>>, %arg5: memref<1x256xf32, #tpu.memory_space<vmem>>, %arg6: memref<8x256xbf16, #tpu.memory_space<vmem>>) attributes {dimension_semantics = [#tpu.dimension_semantics<parallel>], iteration_bounds = array<i64: 1>, scalar_prefetch = 0 : i64, scratch_operands = 0 : i64, tpu.core_type = #tpu.core_type<tc>, window_params = [{transform_indices = @transform_0, window_bounds = array<i64: 8, 1000>}, {pipeline_mode = #tpu.pipeline_mode<synchronous>, transform_indices = @transform_1, window_bounds = array<i64: 1000, 512>}, {pipeline_mode = #tpu.pipeline_mode<synchronous>, transform_indices = @transform_2, window_bounds = array<i64: 1, 512>}, {pipeline_mode = #tpu.pipeline_mode<synchronous>, transform_indices = @transform_3, window_bounds = array<i64: 512, 256>}, {pipeline_mode = #tpu.pipeline_mode<synchronous>, transform_indices = @transform_4, window_bounds = array<i64: 1, 256>}, {transform_indices = @transform_5, window_bounds = array<i64: 8, 256>}]} {
    %c0 = arith.constant 0 : index
    %c0_0 = arith.constant 0 : index
    %0 = vector.load %arg1[%c0, %c0_0] : memref<8x1000xf32, #tpu.memory_space<vmem>>, vector<8x1000xf32>
    %1 = arith.truncf %0 : vector<8x1000xf32> to vector<8x1000xbf16>
    %c0_1 = arith.constant 0 : index
    %c0_2 = arith.constant 0 : index
    %2 = vector.load %arg2[%c0_1, %c0_2] : memref<1000x512xbf16, #tpu.memory_space<vmem>>, vector<1000x512xbf16>
    %cst = arith.constant dense<0.000000e+00> : vector<8x512xf32>
    %3 = tpu.matmul %1, %2, %cst {dimension_numbers = #tpu.dot_dimension_numbers<[1], [0], [0], [1], [0, 0, 1, 1], [], []>} : vector<8x1000xbf16>, vector<1000x512xbf16>, vector<8x512xf32> -> vector<8x512xf32>
    %c0_3 = arith.constant 0 : index
    %c0_4 = arith.constant 0 : index
    %4 = vector.load %arg3[%c0_3, %c0_4] : memref<1x512xf32, #tpu.memory_space<vmem>>, vector<1x512xf32>
    %5 = vector.broadcast %4 : vector<1x512xf32> to vector<8x512xf32>
    %6 = arith.addf %3, %5 : vector<8x512xf32>
    %cst_5 = arith.constant 1.000000e-01 : f32
    %7 = vector.broadcast %cst_5 : f32 to vector<8x512xf32>
    %8 = arith.mulf %7, %6 : vector<8x512xf32>
    %9 = arith.maximumf %6, %8 : vector<8x512xf32>
    %10 = arith.truncf %9 : vector<8x512xf32> to vector<8x512xbf16>
    %c0_6 = arith.constant 0 : index
    %c0_7 = arith.constant 0 : index
    %11 = vector.load %arg4[%c0_6, %c0_7] : memref<512x256xbf16, #tpu.memory_space<vmem>>, vector<512x256xbf16>
    %cst_8 = arith.constant dense<0.000000e+00> : vector<8x256xf32>
    %12 = tpu.matmul %10, %11, %cst_8 {dimension_numbers = #tpu.dot_dimension_numbers<[1], [0], [0], [1], [0, 0, 1, 1], [], []>} : vector<8x512xbf16>, vector<512x256xbf16>, vector<8x256xf32> -> vector<8x256xf32>
    %c0_9 = arith.constant 0 : index
    %c0_10 = arith.constant 0 : index
    %13 = vector.load %arg5[%c0_9, %c0_10] : memref<1x256xf32, #tpu.memory_space<vmem>>, vector<1x256xf32>
    %14 = vector.broadcast %13 : vector<1x256xf32> to vector<8x256xf32>
    %15 = arith.addf %12, %14 : vector<8x256xf32>
    %16 = arith.truncf %15 : vector<8x256xf32> to vector<8x256xbf16>
    %c0_11 = arith.constant 0 : index
    %c0_12 = arith.constant 0 : index
    %17 = vector.load %arg6[%c0_11, %c0_12] : memref<8x256xbf16, #tpu.memory_space<vmem>>, vector<8x256xbf16>
    tpu.vector_store %arg6[%c0_11, %c0_12], %16 {strides = array<i32>} : memref<8x256xbf16, #tpu.memory_space<vmem>>, vector<8x256xbf16>,
    return
  }
  func.func @transform_0(%arg0: i32) -> (i32, i32) {
    %c0_i32 = arith.constant 0 : i32
    %c0_i32_0 = arith.constant 0 : i32
    return %arg0, %c0_i32 : i32, i32
  }
  func.func @transform_1(%arg0: i32) -> (i32, i32) {
    %c0_i32 = arith.constant 0 : i32
    %c0_i32_0 = arith.constant 0 : i32
    %c0_i32_1 = arith.constant 0 : i32
    return %c0_i32, %c0_i32_0 : i32, i32
  }
  func.func @transform_2(%arg0: i32) -> (i32, i32) {
    %c0_i32 = arith.constant 0 : i32
    %c0_i32_0 = arith.constant 0 : i32
    %c0_i32_1 = arith.constant 0 : i32
    return %c0_i32, %c0_i32_0 : i32, i32
  }
  func.func @transform_3(%arg0: i32) -> (i32, i32) {
    %c0_i32 = arith.constant 0 : i32
    %c0_i32_0 = arith.constant 0 : i32
    %c0_i32_1 = arith.constant 0 : i32
    return %c0_i32, %c0_i32_0 : i32, i32
  }
  func.func @transform_4(%arg0: i32) -> (i32, i32) {
    %c0_i32 = arith.constant 0 : i32
    %c0_i32_0 = arith.constant 0 : i32
    %c0_i32_1 = arith.constant 0 : i32
    return %c0_i32, %c0_i32_0 : i32, i32
  }
  func.func @transform_5(%arg0: i32) -> (i32, i32) {
    %c0_i32 = arith.constant 0 : i32
    %c0_i32_0 = arith.constant 0 : i32
    return %arg0, %c0_i32 : i32, i32
  }
}

</mosaic_0001>

<llo_original>
// kernel: resnet_fc.1
$region0: #{resnet_fc.1}
  #allocation0 [shape = 'u32[]', space=smem, size = 0x4, offset = 0x4, fixed_abs, tag = 'smem constant byte address 0x4 - core index']
  #allocation1 [shape = 'u32[144,128]{1,0:T(1,128)}', space=vmem, size = 0x12000, scoped, tag = 'internal scratch']
  %s0 = inlined_call_operand.vmem [shape: f32[2,1000], index: 0, kind: input, shape index: {}]
  %s1 = inlined_call_operand.hbm [shape: bf16[1000,512], index: 1, kind: input, shape index: {}]
  %s2 = inlined_call_operand.vmem [shape: f32[1,512], index: 2, kind: input, shape index: {}]
  %s3 = inlined_call_operand.vmem [shape: bf16[512,256], index: 3, kind: input, shape index: {}]
  %s4 = inlined_call_operand.vmem [shape: f32[1,256], index: 4, kind: input, shape index: {}]
  %s5 = inlined_call_operand.hbm [shape: bf16[2,256], index: 5, kind: output, shape index: {}]
  %s6 = sld [smem:[#allocation0]]
  $region34: #{resnet_fc.1} parent=0
    _
  %s8 = ssub.s32 1, %s6
  %s9 = scalar_select 0, %s8, %s6
  $region1: #{resnet_fc.1} parent=0
    #allocation2 [shape = 'u8[1024000]{0}', space=vmem, size = 0xfa000, scoped, tag = 'input window, operand 1, single buffered']
    #allocation3 [shape = 's32[1]{0}', space=sflag, size = 0x4, scoped, tag = 'scoped memory for resnet_fc.1']
    #allocation4 [shape = 's32[1]{0}', space=sflag, size = 0x4, scoped, tag = 'scoped memory for resnet_fc.1']
    #allocation5 [shape = 'u8[4096]{0}', space=vmem, size = 0x1000, scoped, tag = 'output window, operand 0, single buffered']
    %10 = vsyncpa [#allocation3], 0
    %11 = vsyncpa [#allocation4], 0
    // Predicated region
    $region2: #{resnet_fc.1} parent=1 // pred_check
      _
    $region3: #{resnet_fc.1} parent=1 // pred_check_branch
      %13 = sbr.rel (0) target = $region5
    $region4: #{resnet_fc.1} parent=1 // pred_region
      _
    $region5: #{resnet_fc.1} parent=1 // pred_fallthru
      _
    // Predicated region
    $region6: #{resnet_fc.1} parent=1 // pred_check
      _
    $region7: #{resnet_fc.1} parent=1 // pred_check_branch
      %15 = sbr.rel (0) target = $region9
    $region8: #{resnet_fc.1} parent=1 // pred_region
      %s17 = ssub.s32 32000, 32000
      %18 = vsyncadd [#allocation3], %s17
      %s19 = sshll.u32 [#allocation2], 4
      %s20 = int_to_ptr.vmem [resolvable:$true] %s19
      %25 = dma.hbm_to_vmem [thread:$0]  %s1, 32000, %s20, [#allocation3], 256, 256, 16
    $region9: #{resnet_fc.1} parent=1 // pred_fallthru
      _
    // Predicated region
    $region10: #{resnet_fc.1} parent=1 // pred_check
      _
    $region11: #{resnet_fc.1} parent=1 // pred_check_branch
      %27 = sbr.rel (0) target = $region13
    $region12: #{resnet_fc.1} parent=1 // pred_region
      _
    $region13: #{resnet_fc.1} parent=1 // pred_fallthru
      _
    // Predicated region
    $region14: #{resnet_fc.1} parent=1 // pred_check
      _
    $region15: #{resnet_fc.1} parent=1 // pred_check_branch
      %29 = sbr.rel (0) target = $region17
    $region16: #{resnet_fc.1} parent=1 // pred_region
      _
    $region17: #{resnet_fc.1} parent=1 // pred_fallthru
      _
    // Predicated region
    $region18: #{resnet_fc.1} parent=1 // pred_check
      _
    $region19: #{resnet_fc.1} parent=1 // pred_check_branch
      %31 = sbr.rel (0) target = $region21
    $region20: #{resnet_fc.1} parent=1 // pred_region
      _
    $region21: #{resnet_fc.1} parent=1 // pred_fallthru
      _
    // Predicated region
    $region22: #{resnet_fc.1} parent=1 // pred_check
      _
    $region23: #{resnet_fc.1} parent=1 // pred_check_branch
      %33 = sbr.rel (0) target = $region25
    $region24: #{resnet_fc.1} parent=1 // pred_region
      %34 = dma.done [#allocation3], 32000
    $region25: #{resnet_fc.1} parent=1 // pred_fallthru
      _
    %v36 = vld [vmem:[%s0] sm:$0xff]
    %v37 = vld [vmem:[%s0 + $0x8] sm:$0xff]
    %v38 = vld [vmem:[%s0 + $0x10] sm:$0xff]
    %v39 = vld [vmem:[%s0 + $0x18] sm:$0xff]
    %v40 = vld [vmem:[%s0 + $0x20] sm:$0xff]
    %v41 = vld [vmem:[%s0 + $0x28] sm:$0xff]
    %v42 = vld [vmem:[%s0 + $0x30] sm:$0xff]
    %v43 = vld [vmem:[%s0 + $0x38] sm:$0xff]
    %v52 = vcombine.low %v36, %v38
    %v53 = vcombine.high %v36, %v38
    %v54 = vcombine.low %v40, %v42
    %v55 = vcombine.high %v40, %v42
    %v57 = vunpack.c.l.s4 1983009808
    %v58 = vunpack.c.0.s8 %v57
    %v59 = vlaneseq
    %v60 = vshrl.u32 %v59, 7
    %v61 = vsub.s32 %v58, %v60
    %v62 = vrot.slane %v52, %v61
    %v64 = vunpack.c.l.s4 1983009808
    %v65 = vunpack.c.0.s8 %v64
    %v66 = vlaneseq
    %v67 = vshrl.u32 %v66, 7
    %v68 = vsub.s32 %v65, %v67
    %v69 = vrot.slane %v53, %v68
    %v71 = vunpack.c.l.s4 1983009808
    %v72 = vunpack.c.0.s8 %v71
    %v73 = vlaneseq
    %v74 = vshrl.u32 %v73, 7
    %v75 = vsub.s32 %v72, %v74
    %v76 = vrot.slane %v54, %v75
    %v78 = vunpack.c.l.s4 1983009808
    %v79 = vunpack.c.0.s8 %v78
    %v80 = vlaneseq
    %v81 = vshrl.u32 %v80, 7
    %v82 = vsub.s32 %v79, %v81
    %v83 = vrot.slane %v55, %v82
    %v84 = vcombine.low %v62, %v76
    %v85 = vcombine.high %v62, %v76
    %v86 = vcombine.low %v69, %v83
    %v87 = vcombine.high %v69, %v83
    %v88 = vcombine.low %v37, %v39
    %v89 = vcombine.high %v37, %v39
    %v90 = vcombine.low %v41, %v43
    %v91 = vcombine.high %v41, %v43
    %v93 = vunpack.c.l.s4 1983009808
    %v94 = vunpack.c.0.s8 %v93
    %v95 = vlaneseq
    %v96 = vshrl.u32 %v95, 7
    %v97 = vsub.s32 %v94, %v96
    %v98 = vrot.slane %v88, %v97
    %v100 = vunpack.c.l.s4 1983009808
    %v101 = vunpack.c.0.s8 %v100
    %v102 = vlaneseq
    %v103 = vshrl.u32 %v102, 7
    %v104 = vsub.s32 %v101, %v103
    %v105 = vrot.slane %v89, %v104
    %v107 = vunpack.c.l.s4 1983009808
    %v108 = vunpack.c.0.s8 %v107
    %v109 = vlaneseq
    %v110 = vshrl.u32 %v109, 7
    %v111 = vsub.s32 %v108, %v110
    %v112 = vrot.slane %v90, %v111
    %v114 = vunpack.c.l.s4 1983009808
    %v115 = vunpack.c.0.s8 %v114
    %v116 = vlaneseq
    %v117 = vshrl.u32 %v116, 7
    %v118 = vsub.s32 %v115, %v117
    %v119 = vrot.slane %v91, %v118
    %v120 = vcombine.low %v98, %v112
    %v121 = vcombine.high %v98, %v112
    %v122 = vcombine.low %v105, %v119
    %v123 = vcombine.high %v105, %v119
    %v132 = vpack.c.bf16 %v84, %v84
    %v133 = vpack.c.bf16 %v85, %v85
    %v134 = vpack.c.bf16 %v86, %v86
    %v135 = vpack.c.bf16 %v87, %v87
    %v136 = vpack.c.bf16 %v120, %v120
    %v137 = vpack.c.bf16 %v121, %v121
    %v138 = vpack.c.bf16 %v122, %v122
    %v139 = vpack.c.bf16 %v123, %v123
    %v140 = vld [vmem:[#allocation2] sm:$0xff]
    %v141 = vld [vmem:[#allocation2 + $0x8] sm:$0xff]
    %v142 = vld [vmem:[#allocation2 + $0x10] sm:$0xff]
    %v143 = vld [vmem:[#allocation2 + $0x18] sm:$0xff]
    %v144 = vld [vmem:[#allocation2 + $0x20] sm:$0xff]
    %v145 = vld [vmem:[#allocation2 + $0x28] sm:$0xff]
    %v146 = vld [vmem:[#allocation2 + $0x30] sm:$0xff]
    %v147 = vld [vmem:[#allocation2 + $0x38] sm:$0xff]
    %v148 = vld [vmem:[#allocation2 + $0x40] sm:$0xff]
    %v149 = vld [vmem:[#allocation2 + $0x48] sm:$0xff]
    %v150 = vld [vmem:[#allocation2 + $0x50] sm:$0xff]
    %v151 = vld [vmem:[#allocation2 + $0x58] sm:$0xff]
    %v152 = vld [vmem:[#allocation2 + $0x60] sm:$0xff]
    %v153 = vld [vmem:[#allocation2 + $0x68] sm:$0xff]
    %v154 = vld [vmem:[#allocation2 + $0x70] sm:$0xff]
    %v155 = vld [vmem:[#allocation2 + $0x78] sm:$0xff]
    %v156 = vld [vmem:[#allocation2 + $0x80] sm:$0xff]
    %v157 = vld [vmem:[#allocation2 + $0x88] sm:$0xff]
    %v158 = vld [vmem:[#allocation2 + $0x90] sm:$0xff]
    %v159 = vld [vmem:[#allocation2 + $0x98] sm:$0xff]
    %v160 = vld [vmem:[#allocation2 + $0xa0] sm:$0xff]
    %v161 = vld [vmem:[#allocation2 + $0xa8] sm:$0xff]
    %v162 = vld [vmem:[#allocation2 + $0xb0] sm:$0xff]
    %v163 = vld [vmem:[#allocation2 + $0xb8] sm:$0xff]
    %v164 = vld [vmem:[#allocation2 + $0xc0] sm:$0xff]
    %v165 = vld [vmem:[#allocation2 + $0xc8] sm:$0xff]
    %v166 = vld [vmem:[#allocation2 + $0xd0] sm:$0xff]
    %v167 = vld [vmem:[#allocation2 + $0xd8] sm:$0xff]
    %v168 = vld [vmem:[#allocation2 + $0xe0] sm:$0xff]
    %v169 = vld [vmem:[#allocation2 + $0xe8] sm:$0xff]
    %v170 = vld [vmem:[#allocation2 + $0xf0] sm:$0xff]
    %v171 = vld [vmem:[#allocation2 + $0xf8] sm:$0xff]
    %v172 = vld [vmem:[#allocation2 + $0x100] sm:$0xff]
    %v173 = vld [vmem:[#allocation2 + $0x108] sm:$0xff]
    %v174 = vld [vmem:[#allocation2 + $0x110] sm:$0xff]
    %v175 = vld [vmem:[#allocation2 + $0x118] sm:$0xff]
    %v176 = vld [vmem:[#allocation2 + $0x120] sm:$0xff]
    %v177 = vld [vmem:[#allocation2 + $0x128] sm:$0xff]
    %v178 = vld [vmem:[#allocation2 + $0x130] sm:$0xff]
    %v179 = vld [vmem:[#allocation2 + $0x138] sm:$0xff]
    %v180 = vld [vmem:[#allocation2 + $0x140] sm:$0xff]
    %v181 = vld [vmem:[#allocation2 + $0x148] sm:$0xff]
    %v182 = vld [vmem:[#allocation2 + $0x150] sm:$0xff]
    %v183 = vld [vmem:[#allocation2 + $0x158] sm:$0xff]
    %v184 = vld [vmem:[#allocation2 + $0x160] sm:$0xff]
    %v185 = vld [vmem:[#allocation2 + $0x168] sm:$0xff]
    %v186 = vld [vmem:[#allocation2 + $0x170] sm:$0xff]
    %v187 = vld [vmem:[#allocation2 + $0x178] sm:$0xff]
    %v188 = vld [vmem:[#allocation2 + $0x180] sm:$0xff]
    %v189 = vld [vmem:[#allocation2 + $0x188] sm:$0xff]
    %v190 = vld [vmem:[#allocation2 + $0x190] sm:$0xff]
    %v191 = vld [vmem:[#allocation2 + $0x198] sm:$0xff]
    %v192 = vld [vmem:[#allocation2 + $0x1a0] sm:$0xff]
    %v193 = vld [vmem:[#allocation2 + $0x1a8] sm:$0xff]
    %v194 = vld [vmem:[#allocation2 + $0x1b0] sm:$0xff]
    %v195 = vld [vmem:[#allocation2 + $0x1b8] sm:$0xff]
    %v196 = vld [vmem:[#allocation2 + $0x1c0] sm:$0xff]
    %v197 = vld [vmem:[#allocation2 + $0x1c8] sm:$0xff]
    %v198 = vld [vmem:[#allocation2 + $0x1d0] sm:$0xff]
    %v199 = vld [vmem:[#allocation2 + $0x1d8] sm:$0xff]
    %v200 = vld [vmem:[#allocation2 + $0x1e0] sm:$0xff]
    %v201 = vld [vmem:[#allocation2 + $0x1e8] sm:$0xff]
    %v202 = vld [vmem:[#allocation2 + $0x1f0] sm:$0xff]
    %v203 = vld [vmem:[#allocation2 + $0x1f8] sm:$0xff]
    %v204 = vld [vmem:[#allocation2 + $0x200] sm:$0xff]
    %v205 = vld [vmem:[#allocation2 + $0x208] sm:$0xff]
    %v206 = vld [vmem:[#allocation2 + $0x210] sm:$0xff]
    %v207 = vld [vmem:[#allocation2 + $0x218] sm:$0xff]
    %v208 = vld [vmem:[#allocation2 + $0x220] sm:$0xff]
    %v209 = vld [vmem:[#allocation2 + $0x228] sm:$0xff]
    %v210 = vld [vmem:[#allocation2 + $0x230] sm:$0xff]
    %v211 = vld [vmem:[#allocation2 + $0x238] sm:$0xff]
    %v212 = vld [vmem:[#allocation2 + $0x240] sm:$0xff]
    %v213 = vld [vmem:[#allocation2 + $0x248] sm:$0xff]
    %v214 = vld [vmem:[#allocation2 + $0x250] sm:$0xff]
    %v215 = vld [vmem:[#allocation2 + $0x258] sm:$0xff]
    %v216 = vld [vmem:[#allocation2 + $0x260] sm:$0xff]
    %v217 = vld [vmem:[#allocation2 + $0x268] sm:$0xff]
    %v218 = vld [vmem:[#allocation2 + $0x270] sm:$0xff]
    %v219 = vld [vmem:[#allocation2 + $0x278] sm:$0xff]
    %v220 = vld [vmem:[#allocation2 + $0x280] sm:$0xff]
    %v221 = vld [vmem:[#allocation2 + $0x288] sm:$0xff]
    %v222 = vld [vmem:[#allocation2 + $0x290] sm:$0xff]
    %v223 = vld [vmem:[#allocation2 + $0x298] sm:$0xff]
    %v224 = vld [vmem:[#allocation2 + $0x2a0] sm:$0xff]
    %v225 = vld [vmem:[#allocation2 + $0x2a8] sm:$0xff]
    %v226 = vld [vmem:[#allocation2 + $0x2b0] sm:$0xff]
    %v227 = vld [vmem:[#allocation2 + $0x2b8] sm:$0xff]
    %v228 = vld [vmem:[#allocation2 + $0x2c0] sm:$0xff]
    %v229 = vld [vmem:[#allocation2 + $0x2c8] sm:$0xff]
    %v230 = vld [vmem:[#allocation2 + $0x2d0] sm:$0xff]
    %v231 = vld [vmem:[#allocation2 + $0x2d8] sm:$0xff]
    %v232 = vld [vmem:[#allocation2 + $0x2e0] sm:$0xff]
    %v233 = vld [vmem:[#allocation2 + $0x2e8] sm:$0xff]
    %v234 = vld [vmem:[#allocation2 + $0x2f0] sm:$0xff]
    %v235 = vld [vmem:[#allocation2 + $0x2f8] sm:$0xff]
    %v236 = vld [vmem:[#allocation2 + $0x300] sm:$0xff]
    %v237 = vld [vmem:[#allocation2 + $0x308] sm:$0xff]
    %v238 = vld [vmem:[#allocation2 + $0x310] sm:$0xff]
    %v239 = vld [vmem:[#allocation2 + $0x318] sm:$0xff]
    %v240 = vld [vmem:[#allocation2 + $0x320] sm:$0xff]
    %v241 = vld [vmem:[#allocation2 + $0x328] sm:$0xff]
    %v242 = vld [vmem:[#allocation2 + $0x330] sm:$0xff]
    %v243 = vld [vmem:[#allocation2 + $0x338] sm:$0xff]
    %v244 = vld [vmem:[#allocation2 + $0x340] sm:$0xff]
    %v245 = vld [vmem:[#allocation2 + $0x348] sm:$0xff]
    %v246 = vld [vmem:[#allocation2 + $0x350] sm:$0xff]
    %v247 = vld [vmem:[#allocation2 + $0x358] sm:$0xff]
    %v248 = vld [vmem:[#allocation2 + $0x360] sm:$0xff]
    %v249 = vld [vmem:[#allocation2 + $0x368] sm:$0xff]
    %v250 = vld [vmem:[#allocation2 + $0x370] sm:$0xff]
    %v251 = vld [vmem:[#allocation2 + $0x378] sm:$0xff]
    %v252 = vld [vmem:[#allocation2 + $0x380] sm:$0xff]
    %v253 = vld [vmem:[#allocation2 + $0x388] sm:$0xff]
    %v254 = vld [vmem:[#allocation2 + $0x390] sm:$0xff]
    %v255 = vld [vmem:[#allocation2 + $0x398] sm:$0xff]
    %v256 = vld [vmem:[#allocation2 + $0x3a0] sm:$0xff]
    %v257 = vld [vmem:[#allocation2 + $0x3a8] sm:$0xff]
    %v258 = vld [vmem:[#allocation2 + $0x3b0] sm:$0xff]
    %v259 = vld [vmem:[#allocation2 + $0x3b8] sm:$0xff]
    %v260 = vld [vmem:[#allocation2 + $0x3c0] sm:$0xff]
    %v261 = vld [vmem:[#allocation2 + $0x3c8] sm:$0xff]
    %v262 = vld [vmem:[#allocation2 + $0x3d0] sm:$0xff]
    %v263 = vld [vmem:[#allocation2 + $0x3d8] sm:$0xff]
    %v264 = vld [vmem:[#allocation2 + $0x3e0] sm:$0xff]
    %v265 = vld [vmem:[#allocation2 + $0x3e8] sm:$0xff]
    %v266 = vld [vmem:[#allocation2 + $0x3f0] sm:$0xff]
    %v267 = vld [vmem:[#allocation2 + $0x3f8] sm:$0xff]
    %v268 = vld [vmem:[#allocation2 + $0x400] sm:$0xff]
    %v269 = vld [vmem:[#allocation2 + $0x408] sm:$0xff]
    %v270 = vld [vmem:[#allocation2 + $0x410] sm:$0xff]
    %v271 = vld [vmem:[#allocation2 + $0x418] sm:$0xff]
    %v272 = vld [vmem:[#allocation2 + $0x420] sm:$0xff]
    %v273 = vld [vmem:[#allocation2 + $0x428] sm:$0xff]
    %v274 = vld [vmem:[#allocation2 + $0x430] sm:$0xff]
    %v275 = vld [vmem:[#allocation2 + $0x438] sm:$0xff]
    %v276 = vld [vmem:[#allocation2 + $0x440] sm:$0xff]
    %v277 = vld [vmem:[#allocation2 + $0x448] sm:$0xff]
    %v278 = vld [vmem:[#allocation2 + $0x450] sm:$0xff]
    %v279 = vld [vmem:[#allocation2 + $0x458] sm:$0xff]
    %v280 = vld [vmem:[#allocation2 + $0x460] sm:$0xff]
    %v281 = vld [vmem:[#allocation2 + $0x468] sm:$0xff]
    %v282 = vld [vmem:[#allocation2 + $0x470] sm:$0xff]
    %v283 = vld [vmem:[#allocation2 + $0x478] sm:$0xff]
    %v284 = vld [vmem:[#allocation2 + $0x480] sm:$0xff]
    %v285 = vld [vmem:[#allocation2 + $0x488] sm:$0xff]
    %v286 = vld [vmem:[#allocation2 + $0x490] sm:$0xff]
    %v287 = vld [vmem:[#allocation2 + $0x498] sm:$0xff]
    %v288 = vld [vmem:[#allocation2 + $0x4a0] sm:$0xff]
    %v289 = vld [vmem:[#allocation2 + $0x4a8] sm:$0xff]
    %v290 = vld [vmem:[#allocation2 + $0x4b0] sm:$0xff]
    %v291 = vld [vmem:[#allocation2 + $0x4b8] sm:$0xff]
    %v292 = vld [vmem:[#allocation2 + $0x4c0] sm:$0xff]
    %v293 = vld [vmem:[#allocation2 + $0x4c8] sm:$0xff]
    %v294 = vld [vmem:[#allocation2 + $0x4d0] sm:$0xff]
    %v295 = vld [vmem:[#allocation2 + $0x4d8] sm:$0xff]
    %v296 = vld [vmem:[#allocation2 + $0x4e0] sm:$0xff]
    %v297 = vld [vmem:[#allocation2 + $0x4e8] sm:$0xff]
    %v298 = vld [vmem:[#allocation2 + $0x4f0] sm:$0xff]
    %v299 = vld [vmem:[#allocation2 + $0x4f8] sm:$0xff]
    %v300 = vld [vmem:[#allocation2 + $0x500] sm:$0xff]
    %v301 = vld [vmem:[#allocation2 + $0x508] sm:$0xff]
    %v302 = vld [vmem:[#allocation2 + $0x510] sm:$0xff]
    %v303 = vld [vmem:[#allocation2 + $0x518] sm:$0xff]
    %v304 = vld [vmem:[#allocation2 + $0x520] sm:$0xff]
    %v305 = vld [vmem:[#allocation2 + $0x528] sm:$0xff]
    %v306 = vld [vmem:[#allocation2 + $0x530] sm:$0xff]
    %v307 = vld [vmem:[#allocation2 + $0x538] sm:$0xff]
    %v308 = vld [vmem:[#allocation2 + $0x540] sm:$0xff]
    %v309 = vld [vmem:[#allocation2 + $0x548] sm:$0xff]
    %v310 = vld [vmem:[#allocation2 + $0x550] sm:$0xff]
    %v311 = vld [vmem:[#allocation2 + $0x558] sm:$0xff]
    %v312 = vld [vmem:[#allocation2 + $0x560] sm:$0xff]
    %v313 = vld [vmem:[#allocation2 + $0x568] sm:$0xff]
    %v314 = vld [vmem:[#allocation2 + $0x570] sm:$0xff]
    %v315 = vld [vmem:[#allocation2 + $0x578] sm:$0xff]
    %v316 = vld [vmem:[#allocation2 + $0x580] sm:$0xff]
    %v317 = vld [vmem:[#allocation2 + $0x588] sm:$0xff]
    %v318 = vld [vmem:[#allocation2 + $0x590] sm:$0xff]
    %v319 = vld [vmem:[#allocation2 + $0x598] sm:$0xff]
    %v320 = vld [vmem:[#allocation2 + $0x5a0] sm:$0xff]
    %v321 = vld [vmem:[#allocation2 + $0x5a8] sm:$0xff]
    %v322 = vld [vmem:[#allocation2 + $0x5b0] sm:$0xff]
    %v323 = vld [vmem:[#allocation2 + $0x5b8] sm:$0xff]
    %v324 = vld [vmem:[#allocation2 + $0x5c0] sm:$0xff]
    %v325 = vld [vmem:[#allocation2 + $0x5c8] sm:$0xff]
    %v326 = vld [vmem:[#allocation2 + $0x5d0] sm:$0xff]
    %v327 = vld [vmem:[#allocation2 + $0x5d8] sm:$0xff]
    %v328 = vld [vmem:[#allocation2 + $0x5e0] sm:$0xff]
    %v329 = vld [vmem:[#allocation2 + $0x5e8] sm:$0xff]
    %v330 = vld [vmem:[#allocation2 + $0x5f0] sm:$0xff]
    %v331 = vld [vmem:[#allocation2 + $0x5f8] sm:$0xff]
    %v332 = vld [vmem:[#allocation2 + $0x600] sm:$0xff]
    %v333 = vld [vmem:[#allocation2 + $0x608] sm:$0xff]
    %v334 = vld [vmem:[#allocation2 + $0x610] sm:$0xff]
    %v335 = vld [vmem:[#allocation2 + $0x618] sm:$0xff]
    %v336 = vld [vmem:[#allocation2 + $0x620] sm:$0xff]
    %v337 = vld [vmem:[#allocation2 + $0x628] sm:$0xff]
    %v338 = vld [vmem:[#allocation2 + $0x630] sm:$0xff]
    %v339 = vld [vmem:[#allocation2 + $0x638] sm:$0xff]
    %v340 = vld [vmem:[#allocation2 + $0x640] sm:$0xff]
    %v341 = vld [vmem:[#allocation2 + $0x648] sm:$0xff]
    %v342 = vld [vmem:[#allocation2 + $0x650] sm:$0xff]
    %v343 = vld [vmem:[#allocation2 + $0x658] sm:$0xff]
    %v344 = vld [vmem:[#allocation2 + $0x660] sm:$0xff]
    %v345 = vld [vmem:[#allocation2 + $0x668] sm:$0xff]
    %v346 = vld [vmem:[#allocation2 + $0x670] sm:$0xff]
    %v347 = vld [vmem:[#allocation2 + $0x678] sm:$0xff]
    %v348 = vld [vmem:[#allocation2 + $0x680] sm:$0xff]
    %v349 = vld [vmem:[#allocation2 + $0x688] sm:$0xff]
    %v350 = vld [vmem:[#allocation2 + $0x690] sm:$0xff]
    %v351 = vld [vmem:[#allocation2 + $0x698] sm:$0xff]
    %v352 = vld [vmem:[#allocation2 + $0x6a0] sm:$0xff]
    %v353 = vld [vmem:[#allocation2 + $0x6a8] sm:$0xff]
    %v354 = vld [vmem:[#allocation2 + $0x6b0] sm:$0xff]
    %v355 = vld [vmem:[#allocation2 + $0x6b8] sm:$0xff]
    %v356 = vld [vmem:[#allocation2 + $0x6c0] sm:$0xff]
    %v357 = vld [vmem:[#allocation2 + $0x6c8] sm:$0xff]
    %v358 = vld [vmem:[#allocation2 + $0x6d0] sm:$0xff]
    %v359 = vld [vmem:[#allocation2 + $0x6d8] sm:$0xff]
    %v360 = vld [vmem:[#allocation2 + $0x6e0] sm:$0xff]
    %v361 = vld [vmem:[#allocation2 + $0x6e8] sm:$0xff]
    %v362 = vld [vmem:[#allocation2 + $0x6f0] sm:$0xff]
    %v363 = vld [vmem:[#allocation2 + $0x6f8] sm:$0xff]
    %v364 = vld [vmem:[#allocation2 + $0x700] sm:$0xff]
    %v365 = vld [vmem:[#allocation2 + $0x708] sm:$0xff]
    %v366 = vld [vmem:[#allocation2 + $0x710] sm:$0xff]
    %v367 = vld [vmem:[#allocation2 + $0x718] sm:$0xff]
    %v368 = vld [vmem:[#allocation2 + $0x720] sm:$0xff]
    %v369 = vld [vmem:[#allocation2 + $0x728] sm:$0xff]
    %v370 = vld [vmem:[#allocation2 + $0x730] sm:$0xff]
    %v371 = vld [vmem:[#allocation2 + $0x738] sm:$0xff]
    %v372 = vld [vmem:[#allocation2 + $0x740] sm:$0xff]
    %v373 = vld [vmem:[#allocation2 + $0x748] sm:$0xff]
    %v374 = vld [vmem:[#allocation2 + $0x750] sm:$0xff]
    %v375 = vld [vmem:[#allocation2 + $0x758] sm:$0xff]
    %v376 = vld [vmem:[#allocation2 + $0x760] sm:$0xff]
    %v377 = vld [vmem:[#allocation2 + $0x768] sm:$0xff]
    %v378 = vld [vmem:[#allocation2 + $0x770] sm:$0xff]
    %v379 = vld [vmem:[#allocation2 + $0x778] sm:$0xff]
    %v380 = vld [vmem:[#allocation2 + $0x780] sm:$0xff]
    %v381 = vld [vmem:[#allocation2 + $0x788] sm:$0xff]
    %v382 = vld [vmem:[#allocation2 + $0x790] sm:$0xff]
    %v383 = vld [vmem:[#allocation2 + $0x798] sm:$0xff]
    %v384 = vld [vmem:[#allocation2 + $0x7a0] sm:$0xff]
    %v385 = vld [vmem:[#allocation2 + $0x7a8] sm:$0xff]
    %v386 = vld [vmem:[#allocation2 + $0x7b0] sm:$0xff]
    %v387 = vld [vmem:[#allocation2 + $0x7b8] sm:$0xff]
    %v388 = vld [vmem:[#allocation2 + $0x7c0] sm:$0xff]
    %v389 = vld [vmem:[#allocation2 + $0x7c8] sm:$0xff]
    %v390 = vld [vmem:[%s2] sm:$0xf]
    %v392 = vlaneseq
    %v393 = vshrl.u32 %v392, 7
    %v394 = vsub.s32 0, %v393
    %v395 = vrot.slane %v390, %v394
    %v396 = vlaneseq
    %v397 = vshrl.u32 %v396, 7
    %v398 = vsub.s32 1, %v397
    %v399 = vrot.slane %v390, %v398
    %v400 = vlaneseq
    %v401 = vshrl.u32 %v400, 7
    %v402 = vsub.s32 2, %v401
    %v403 = vrot.slane %v390, %v402
    %v404 = vlaneseq
    %v405 = vshrl.u32 %v404, 7
    %v406 = vsub.s32 3, %v405
    %v407 = vrot.slane %v390, %v406
    %v662 = vunpack.c.l.b16 %v140
    %v663 = vunpack.c.h.b16 %v140
    %v664 = vunpack.c.l.b16 %v141
    %v665 = vunpack.c.h.b16 %v141
    %v666 = vunpack.c.l.b16 %v142
    %v667 = vunpack.c.h.b16 %v142
    %v668 = vunpack.c.l.b16 %v143
    %v669 = vunpack.c.h.b16 %v143
    %v670 = vunpack.c.l.b16 %v144
    %v671 = vunpack.c.h.b16 %v144
    %v672 = vunpack.c.l.b16 %v145
    %v673 = vunpack.c.h.b16 %v145
    %v674 = vunpack.c.l.b16 %v146
    %v675 = vunpack.c.h.b16 %v146
    %v676 = vunpack.c.l.b16 %v147
    %v677 = vunpack.c.h.b16 %v147
    %v678 = vunpack.c.l.b16 %v148
    %v679 = vunpack.c.h.b16 %v148
    %v680 = vunpack.c.l.b16 %v149
    %v681 = vunpack.c.h.b16 %v149
    %v682 = vunpack.c.l.b16 %v150
    %v683 = vunpack.c.h.b16 %v150
    %v684 = vunpack.c.l.b16 %v151
    %v685 = vunpack.c.h.b16 %v151
    %v686 = vunpack.c.l.b16 %v152
    %v687 = vunpack.c.h.b16 %v152
    %v688 = vunpack.c.l.b16 %v153
    %v689 = vunpack.c.h.b16 %v153
    %v690 = vunpack.c.l.b16 %v154
    %v691 = vunpack.c.h.b16 %v154
    %v692 = vunpack.c.l.b16 %v155
    %v693 = vunpack.c.h.b16 %v155
    %v694 = vunpack.c.l.b16 %v156
    %v695 = vunpack.c.h.b16 %v156
    %v696 = vunpack.c.l.b16 %v157
    %v697 = vunpack.c.h.b16 %v157
    %v698 = vunpack.c.l.b16 %v158
    %v699 = vunpack.c.h.b16 %v158
    %v700 = vunpack.c.l.b16 %v159
    %v701 = vunpack.c.h.b16 %v159
    %v702 = vunpack.c.l.b16 %v160
    %v703 = vunpack.c.h.b16 %v160
    %v704 = vunpack.c.l.b16 %v161
    %v705 = vunpack.c.h.b16 %v161
    %v706 = vunpack.c.l.b16 %v162
    %v707 = vunpack.c.h.b16 %v162
    %v708 = vunpack.c.l.b16 %v163
    %v709 = vunpack.c.h.b16 %v163
    %v710 = vunpack.c.l.b16 %v164
    %v711 = vunpack.c.h.b16 %v164
    %v712 = vunpack.c.l.b16 %v165
    %v713 = vunpack.c.h.b16 %v165
    %v714 = vunpack.c.l.b16 %v166
    %v715 = vunpack.c.h.b16 %v166
    %v716 = vunpack.c.l.b16 %v167
    %v717 = vunpack.c.h.b16 %v167
    %v718 = vunpack.c.l.b16 %v168
    %v719 = vunpack.c.h.b16 %v168
    %v720 = vunpack.c.l.b16 %v169
    %v721 = vunpack.c.h.b16 %v169
    %v722 = vunpack.c.l.b16 %v170
    %v723 = vunpack.c.h.b16 %v170
    %v724 = vunpack.c.l.b16 %v171
    %v725 = vunpack.c.h.b16 %v171
    %v726 = vunpack.c.l.b16 %v172
    %v727 = vunpack.c.h.b16 %v172
    %v728 = vunpack.c.l.b16 %v173
    %v729 = vunpack.c.h.b16 %v173
    %v730 = vunpack.c.l.b16 %v174
    %v731 = vunpack.c.h.b16 %v174
    %v732 = vunpack.c.l.b16 %v175
    %v733 = vunpack.c.h.b16 %v175
    %v734 = vunpack.c.l.b16 %v176
    %v735 = vunpack.c.h.b16 %v176
    %v736 = vunpack.c.l.b16 %v177
    %v737 = vunpack.c.h.b16 %v177
    %v738 = vunpack.c.l.b16 %v178
    %v739 = vunpack.c.h.b16 %v178
    %v740 = vunpack.c.l.b16 %v179
    %v741 = vunpack.c.h.b16 %v179
    %v742 = vunpack.c.l.b16 %v180
    %v743 = vunpack.c.h.b16 %v180
    %v744 = vunpack.c.l.b16 %v181
    %v745 = vunpack.c.h.b16 %v181
    %v746 = vunpack.c.l.b16 %v182
    %v747 = vunpack.c.h.b16 %v182
    %v748 = vunpack.c.l.b16 %v183
    %v749 = vunpack.c.h.b16 %v183
    %v750 = vunpack.c.l.b16 %v184
    %v751 = vunpack.c.h.b16 %v184
    %v752 = vunpack.c.l.b16 %v185
    %v753 = vunpack.c.h.b16 %v185
    %v754 = vunpack.c.l.b16 %v186
    %v755 = vunpack.c.h.b16 %v186
    %v756 = vunpack.c.l.b16 %v187
    %v757 = vunpack.c.h.b16 %v187
    %v758 = vunpack.c.l.b16 %v188
    %v759 = vunpack.c.h.b16 %v188
    %v760 = vunpack.c.l.b16 %v189
    %v761 = vunpack.c.h.b16 %v189
    %v762 = vunpack.c.l.b16 %v190
    %v763 = vunpack.c.h.b16 %v190
    %v764 = vunpack.c.l.b16 %v191
    %v765 = vunpack.c.h.b16 %v191
    %v766 = vunpack.c.l.b16 %v192
    %v767 = vunpack.c.h.b16 %v192
    %v768 = vunpack.c.l.b16 %v193
    %v769 = vunpack.c.h.b16 %v193
    %v770 = vunpack.c.l.b16 %v194
    %v771 = vunpack.c.h.b16 %v194
    %v772 = vunpack.c.l.b16 %v195
    %v773 = vunpack.c.h.b16 %v195
    %v774 = vunpack.c.l.b16 %v196
    %v775 = vunpack.c.h.b16 %v196
    %v776 = vunpack.c.l.b16 %v197
    %v777 = vunpack.c.h.b16 %v197
    %v778 = vunpack.c.l.b16 %v198
    %v779 = vunpack.c.h.b16 %v198
    %v780 = vunpack.c.l.b16 %v199
    %v781 = vunpack.c.h.b16 %v199
    %v782 = vunpack.c.l.b16 %v200
    %v783 = vunpack.c.h.b16 %v200
    %v784 = vunpack.c.l.b16 %v201
    %v785 = vunpack.c.h.b16 %v201
    %v786 = vunpack.c.l.b16 %v202
    %v787 = vunpack.c.h.b16 %v202
    %v788 = vunpack.c.l.b16 %v203
    %v789 = vunpack.c.h.b16 %v203
    %v790 = vunpack.c.l.b16 %v204
    %v791 = vunpack.c.h.b16 %v204
    %v792 = vunpack.c.l.b16 %v205
    %v793 = vunpack.c.h.b16 %v205
    %v794 = vunpack.c.l.b16 %v206
    %v795 = vunpack.c.h.b16 %v206
    %v796 = vunpack.c.l.b16 %v207
    %v797 = vunpack.c.h.b16 %v207
    %v798 = vunpack.c.l.b16 %v208
    %v799 = vunpack.c.h.b16 %v208
    %v800 = vunpack.c.l.b16 %v209
    %v801 = vunpack.c.h.b16 %v209
    %v802 = vunpack.c.l.b16 %v210
    %v803 = vunpack.c.h.b16 %v210
    %v804 = vunpack.c.l.b16 %v211
    %v805 = vunpack.c.h.b16 %v211
    %v806 = vunpack.c.l.b16 %v212
    %v807 = vunpack.c.h.b16 %v212
    %v808 = vunpack.c.l.b16 %v213
    %v809 = vunpack.c.h.b16 %v213
    %v810 = vunpack.c.l.b16 %v214
    %v811 = vunpack.c.h.b16 %v214
    %v812 = vunpack.c.l.b16 %v215
    %v813 = vunpack.c.h.b16 %v215
    %v814 = vunpack.c.l.b16 %v216
    %v815 = vunpack.c.h.b16 %v216
    %v816 = vunpack.c.l.b16 %v217
    %v817 = vunpack.c.h.b16 %v217
    %v818 = vunpack.c.l.b16 %v218
    %v819 = vunpack.c.h.b16 %v218
    %v820 = vunpack.c.l.b16 %v219
    %v821 = vunpack.c.h.b16 %v219
    %v822 = vunpack.c.l.b16 %v220
    %v823 = vunpack.c.h.b16 %v220
    %v824 = vunpack.c.l.b16 %v221
    %v825 = vunpack.c.h.b16 %v221
    %v826 = vunpack.c.l.b16 %v222
    %v827 = vunpack.c.h.b16 %v222
    %v828 = vunpack.c.l.b16 %v223
    %v829 = vunpack.c.h.b16 %v223
    %v830 = vunpack.c.l.b16 %v224
    %v831 = vunpack.c.h.b16 %v224
    %v832 = vunpack.c.l.b16 %v225
    %v833 = vunpack.c.h.b16 %v225
    %v834 = vunpack.c.l.b16 %v226
    %v835 = vunpack.c.h.b16 %v226
    %v836 = vunpack.c.l.b16 %v227
    %v837 = vunpack.c.h.b16 %v227
    %v838 = vunpack.c.l.b16 %v228
    %v839 = vunpack.c.h.b16 %v228
    %v840 = vunpack.c.l.b16 %v229
    %v841 = vunpack.c.h.b16 %v229
    %v842 = vunpack.c.l.b16 %v230
    %v843 = vunpack.c.h.b16 %v230
    %v844 = vunpack.c.l.b16 %v231
    %v845 = vunpack.c.h.b16 %v231
    %v846 = vunpack.c.l.b16 %v232
    %v847 = vunpack.c.h.b16 %v232
    %v848 = vunpack.c.l.b16 %v233
    %v849 = vunpack.c.h.b16 %v233
    %v850 = vunpack.c.l.b16 %v234
    %v851 = vunpack.c.h.b16 %v234
    %v852 = vunpack.c.l.b16 %v235
    %v853 = vunpack.c.h.b16 %v235
    %v854 = vunpack.c.l.b16 %v236
    %v855 = vunpack.c.h.b16 %v236
    %v856 = vunpack.c.l.b16 %v237
    %v857 = vunpack.c.h.b16 %v237
    %v858 = vunpack.c.l.b16 %v238
    %v859 = vunpack.c.h.b16 %v238
    %v860 = vunpack.c.l.b16 %v239
    %v861 = vunpack.c.h.b16 %v239
    %v862 = vunpack.c.l.b16 %v240
    %v863 = vunpack.c.h.b16 %v240
    %v864 = vunpack.c.l.b16 %v241
    %v865 = vunpack.c.h.b16 %v241
    %v866 = vunpack.c.l.b16 %v242
    %v867 = vunpack.c.h.b16 %v242
    %v868 = vunpack.c.l.b16 %v243
    %v869 = vunpack.c.h.b16 %v243
    %v870 = vunpack.c.l.b16 %v244
    %v871 = vunpack.c.h.b16 %v244
    %v872 = vunpack.c.l.b16 %v245
    %v873 = vunpack.c.h.b16 %v245
    %v874 = vunpack.c.l.b16 %v246
    %v875 = vunpack.c.h.b16 %v246
    %v876 = vunpack.c.l.b16 %v247
    %v877 = vunpack.c.h.b16 %v247
    %v878 = vunpack.c.l.b16 %v248
    %v879 = vunpack.c.h.b16 %v248
    %v880 = vunpack.c.l.b16 %v249
    %v881 = vunpack.c.h.b16 %v249
    %v882 = vunpack.c.l.b16 %v250
    %v883 = vunpack.c.h.b16 %v250
    %v884 = vunpack.c.l.b16 %v251
    %v885 = vunpack.c.h.b16 %v251
    %v886 = vunpack.c.l.b16 %v252
    %v887 = vunpack.c.h.b16 %v252
    %v888 = vunpack.c.l.b16 %v253
    %v889 = vunpack.c.h.b16 %v253
    %v890 = vunpack.c.l.b16 %v254
    %v891 = vunpack.c.h.b16 %v254
    %v892 = vunpack.c.l.b16 %v255
    %v893 = vunpack.c.h.b16 %v255
    %v894 = vunpack.c.l.b16 %v256
    %v895 = vunpack.c.h.b16 %v256
    %v896 = vunpack.c.l.b16 %v257
    %v897 = vunpack.c.h.b16 %v257
    %v898 = vunpack.c.l.b16 %v258
    %v899 = vunpack.c.h.b16 %v258
    %v900 = vunpack.c.l.b16 %v259
    %v901 = vunpack.c.h.b16 %v259
    %v902 = vunpack.c.l.b16 %v260
    %v903 = vunpack.c.h.b16 %v260
    %v904 = vunpack.c.l.b16 %v261
    %v905 = vunpack.c.h.b16 %v261
    %v906 = vunpack.c.l.b16 %v262
    %v907 = vunpack.c.h.b16 %v262
    %v908 = vunpack.c.l.b16 %v263
    %v909 = vunpack.c.h.b16 %v263
    %v910 = vunpack.c.l.b16 %v264
    %v911 = vunpack.c.h.b16 %v264
    %v912 = vunpack.c.l.b16 %v265
    %v913 = vunpack.c.h.b16 %v265
    %v914 = vunpack.c.l.b16 %v266
    %v915 = vunpack.c.h.b16 %v266
    %v916 = vunpack.c.l.b16 %v267
    %v917 = vunpack.c.h.b16 %v267
    %v918 = vunpack.c.l.b16 %v268
    %v919 = vunpack.c.h.b16 %v268
    %v920 = vunpack.c.l.b16 %v269
    %v921 = vunpack.c.h.b16 %v269
    %v922 = vunpack.c.l.b16 %v270
    %v923 = vunpack.c.h.b16 %v270
    %v924 = vunpack.c.l.b16 %v271
    %v925 = vunpack.c.h.b16 %v271
    %v926 = vunpack.c.l.b16 %v272
    %v927 = vunpack.c.h.b16 %v272
    %v928 = vunpack.c.l.b16 %v273
    %v929 = vunpack.c.h.b16 %v273
    %v930 = vunpack.c.l.b16 %v274
    %v931 = vunpack.c.h.b16 %v274
    %v932 = vunpack.c.l.b16 %v275
    %v933 = vunpack.c.h.b16 %v275
    %v934 = vunpack.c.l.b16 %v276
    %v935 = vunpack.c.h.b16 %v276
    %v936 = vunpack.c.l.b16 %v277
    %v937 = vunpack.c.h.b16 %v277
    %v938 = vunpack.c.l.b16 %v278
    %v939 = vunpack.c.h.b16 %v278
    %v940 = vunpack.c.l.b16 %v279
    %v941 = vunpack.c.h.b16 %v279
    %v942 = vunpack.c.l.b16 %v280
    %v943 = vunpack.c.h.b16 %v280
    %v944 = vunpack.c.l.b16 %v281
    %v945 = vunpack.c.h.b16 %v281
    %v946 = vunpack.c.l.b16 %v282
    %v947 = vunpack.c.h.b16 %v282
    %v948 = vunpack.c.l.b16 %v283
    %v949 = vunpack.c.h.b16 %v283
    %v950 = vunpack.c.l.b16 %v284
    %v951 = vunpack.c.h.b16 %v284
    %v952 = vunpack.c.l.b16 %v285
    %v953 = vunpack.c.h.b16 %v285
    %v954 = vunpack.c.l.b16 %v286
    %v955 = vunpack.c.h.b16 %v286
    %v956 = vunpack.c.l.b16 %v287
    %v957 = vunpack.c.h.b16 %v287
    %v958 = vunpack.c.l.b16 %v288
    %v959 = vunpack.c.h.b16 %v288
    %v960 = vunpack.c.l.b16 %v289
    %v961 = vunpack.c.h.b16 %v289
    %v962 = vunpack.c.l.b16 %v290
    %v963 = vunpack.c.h.b16 %v290
    %v964 = vunpack.c.l.b16 %v291
    %v965 = vunpack.c.h.b16 %v291
    %v966 = vunpack.c.l.b16 %v292
    %v967 = vunpack.c.h.b16 %v292
    %v968 = vunpack.c.l.b16 %v293
    %v969 = vunpack.c.h.b16 %v293
    %v970 = vunpack.c.l.b16 %v294
    %v971 = vunpack.c.h.b16 %v294
    %v972 = vunpack.c.l.b16 %v295
    %v973 = vunpack.c.h.b16 %v295
    %v974 = vunpack.c.l.b16 %v296
    %v975 = vunpack.c.h.b16 %v296
    %v976 = vunpack.c.l.b16 %v297
    %v977 = vunpack.c.h.b16 %v297
    %v978 = vunpack.c.l.b16 %v298
    %v979 = vunpack.c.h.b16 %v298
    %v980 = vunpack.c.l.b16 %v299
    %v981 = vunpack.c.h.b16 %v299
    %v982 = vunpack.c.l.b16 %v300
    %v983 = vunpack.c.h.b16 %v300
    %v984 = vunpack.c.l.b16 %v301
    %v985 = vunpack.c.h.b16 %v301
    %v986 = vunpack.c.l.b16 %v302
    %v987 = vunpack.c.h.b16 %v302
    %v988 = vunpack.c.l.b16 %v303
    %v989 = vunpack.c.h.b16 %v303
    %v990 = vunpack.c.l.b16 %v304
    %v991 = vunpack.c.h.b16 %v304
    %v992 = vunpack.c.l.b16 %v305
    %v993 = vunpack.c.h.b16 %v305
    %v994 = vunpack.c.l.b16 %v306
    %v995 = vunpack.c.h.b16 %v306
    %v996 = vunpack.c.l.b16 %v307
    %v997 = vunpack.c.h.b16 %v307
    %v998 = vunpack.c.l.b16 %v308
    %v999 = vunpack.c.h.b16 %v308
    %v1000 = vunpack.c.l.b16 %v309
    %v1001 = vunpack.c.h.b16 %v309
    %v1002 = vunpack.c.l.b16 %v310
    %v1003 = vunpack.c.h.b16 %v310
    %v1004 = vunpack.c.l.b16 %v311
    %v1005 = vunpack.c.h.b16 %v311
    %v1006 = vunpack.c.l.b16 %v312
    %v1007 = vunpack.c.h.b16 %v312
    %v1008 = vunpack.c.l.b16 %v313
    %v1009 = vunpack.c.h.b16 %v313
    %v1010 = vunpack.c.l.b16 %v314
    %v1011 = vunpack.c.h.b16 %v314
    %v1012 = vunpack.c.l.b16 %v315
    %v1013 = vunpack.c.h.b16 %v315
    %v1014 = vunpack.c.l.b16 %v316
    %v1015 = vunpack.c.h.b16 %v316
    %v1016 = vunpack.c.l.b16 %v317
    %v1017 = vunpack.c.h.b16 %v317
    %v1018 = vunpack.c.l.b16 %v318
    %v1019 = vunpack.c.h.b16 %v318
    %v1020 = vunpack.c.l.b16 %v319
    %v1021 = vunpack.c.h.b16 %v319
    %v1022 = vunpack.c.l.b16 %v320
    %v1023 = vunpack.c.h.b16 %v320
    %v1024 = vunpack.c.l.b16 %v321
    %v1025 = vunpack.c.h.b16 %v321
    %v1026 = vunpack.c.l.b16 %v322
    %v1027 = vunpack.c.h.b16 %v322
    %v1028 = vunpack.c.l.b16 %v323
    %v1029 = vunpack.c.h.b16 %v323
    %v1030 = vunpack.c.l.b16 %v324
    %v1031 = vunpack.c.h.b16 %v324
    %v1032 = vunpack.c.l.b16 %v325
    %v1033 = vunpack.c.h.b16 %v325
    %v1034 = vunpack.c.l.b16 %v326
    %v1035 = vunpack.c.h.b16 %v326
    %v1036 = vunpack.c.l.b16 %v327
    %v1037 = vunpack.c.h.b16 %v327
    %v1038 = vunpack.c.l.b16 %v328
    %v1039 = vunpack.c.h.b16 %v328
    %v1040 = vunpack.c.l.b16 %v329
    %v1041 = vunpack.c.h.b16 %v329
    %v1042 = vunpack.c.l.b16 %v330
    %v1043 = vunpack.c.h.b16 %v330
    %v1044 = vunpack.c.l.b16 %v331
    %v1045 = vunpack.c.h.b16 %v331
    %v1046 = vunpack.c.l.b16 %v332
    %v1047 = vunpack.c.h.b16 %v332
    %v1048 = vunpack.c.l.b16 %v333
    %v1049 = vunpack.c.h.b16 %v333
    %v1050 = vunpack.c.l.b16 %v334
    %v1051 = vunpack.c.h.b16 %v334
    %v1052 = vunpack.c.l.b16 %v335
    %v1053 = vunpack.c.h.b16 %v335
    %v1054 = vunpack.c.l.b16 %v336
    %v1055 = vunpack.c.h.b16 %v336
    %v1056 = vunpack.c.l.b16 %v337
    %v1057 = vunpack.c.h.b16 %v337
    %v1058 = vunpack.c.l.b16 %v338
    %v1059 = vunpack.c.h.b16 %v338
    %v1060 = vunpack.c.l.b16 %v339
    %v1061 = vunpack.c.h.b16 %v339
    %v1062 = vunpack.c.l.b16 %v340
    %v1063 = vunpack.c.h.b16 %v340
    %v1064 = vunpack.c.l.b16 %v341
    %v1065 = vunpack.c.h.b16 %v341
    %v1066 = vunpack.c.l.b16 %v342
    %v1067 = vunpack.c.h.b16 %v342
    %v1068 = vunpack.c.l.b16 %v343
    %v1069 = vunpack.c.h.b16 %v343
    %v1070 = vunpack.c.l.b16 %v344
    %v1071 = vunpack.c.h.b16 %v344
    %v1072 = vunpack.c.l.b16 %v345
    %v1073 = vunpack.c.h.b16 %v345
    %v1074 = vunpack.c.l.b16 %v346
    %v1075 = vunpack.c.h.b16 %v346
    %v1076 = vunpack.c.l.b16 %v347
    %v1077 = vunpack.c.h.b16 %v347
    %v1078 = vunpack.c.l.b16 %v348
    %v1079 = vunpack.c.h.b16 %v348
    %v1080 = vunpack.c.l.b16 %v349
    %v1081 = vunpack.c.h.b16 %v349
    %v1082 = vunpack.c.l.b16 %v350
    %v1083 = vunpack.c.h.b16 %v350
    %v1084 = vunpack.c.l.b16 %v351
    %v1085 = vunpack.c.h.b16 %v351
    %v1086 = vunpack.c.l.b16 %v352
    %v1087 = vunpack.c.h.b16 %v352
    %v1088 = vunpack.c.l.b16 %v353
    %v1089 = vunpack.c.h.b16 %v353
    %v1090 = vunpack.c.l.b16 %v354
    %v1091 = vunpack.c.h.b16 %v354
    %v1092 = vunpack.c.l.b16 %v355
    %v1093 = vunpack.c.h.b16 %v355
    %v1094 = vunpack.c.l.b16 %v356
    %v1095 = vunpack.c.h.b16 %v356
    %v1096 = vunpack.c.l.b16 %v357
    %v1097 = vunpack.c.h.b16 %v357
    %v1098 = vunpack.c.l.b16 %v358
    %v1099 = vunpack.c.h.b16 %v358
    %v1100 = vunpack.c.l.b16 %v359
    %v1101 = vunpack.c.h.b16 %v359
    %v1102 = vunpack.c.l.b16 %v360
    %v1103 = vunpack.c.h.b16 %v360
    %v1104 = vunpack.c.l.b16 %v361
    %v1105 = vunpack.c.h.b16 %v361
    %v1106 = vunpack.c.l.b16 %v362
    %v1107 = vunpack.c.h.b16 %v362
    %v1108 = vunpack.c.l.b16 %v363
    %v1109 = vunpack.c.h.b16 %v363
    %v1110 = vunpack.c.l.b16 %v364
    %v1111 = vunpack.c.h.b16 %v364
    %v1112 = vunpack.c.l.b16 %v365
    %v1113 = vunpack.c.h.b16 %v365
    %v1114 = vunpack.c.l.b16 %v366
    %v1115 = vunpack.c.h.b16 %v366
    %v1116 = vunpack.c.l.b16 %v367
    %v1117 = vunpack.c.h.b16 %v367
    %v1118 = vunpack.c.l.b16 %v368
    %v1119 = vunpack.c.h.b16 %v368
    %v1120 = vunpack.c.l.b16 %v369
    %v1121 = vunpack.c.h.b16 %v369
    %v1122 = vunpack.c.l.b16 %v370
    %v1123 = vunpack.c.h.b16 %v370
    %v1124 = vunpack.c.l.b16 %v371
    %v1125 = vunpack.c.h.b16 %v371
    %v1126 = vunpack.c.l.b16 %v372
    %v1127 = vunpack.c.h.b16 %v372
    %v1128 = vunpack.c.l.b16 %v373
    %v1129 = vunpack.c.h.b16 %v373
    %v1130 = vunpack.c.l.b16 %v374
    %v1131 = vunpack.c.h.b16 %v374
    %v1132 = vunpack.c.l.b16 %v375
    %v1133 = vunpack.c.h.b16 %v375
    %v1134 = vunpack.c.l.b16 %v376
    %v1135 = vunpack.c.h.b16 %v376
    %v1136 = vunpack.c.l.b16 %v377
    %v1137 = vunpack.c.h.b16 %v377
    %v1138 = vunpack.c.l.b16 %v378
    %v1139 = vunpack.c.h.b16 %v378
    %v1140 = vunpack.c.l.b16 %v379
    %v1141 = vunpack.c.h.b16 %v379
    %v1142 = vunpack.c.l.b16 %v380
    %v1143 = vunpack.c.h.b16 %v380
    %v1144 = vunpack.c.l.b16 %v381
    %v1145 = vunpack.c.h.b16 %v381
    %v1146 = vunpack.c.l.b16 %v382
    %v1147 = vunpack.c.h.b16 %v382
    %v1148 = vunpack.c.l.b16 %v383
    %v1149 = vunpack.c.h.b16 %v383
    %v1150 = vunpack.c.l.b16 %v384
    %v1151 = vunpack.c.h.b16 %v384
    %v1152 = vunpack.c.l.b16 %v385
    %v1153 = vunpack.c.h.b16 %v385
    %v1154 = vunpack.c.l.b16 %v386
    %v1155 = vunpack.c.h.b16 %v386
    %v1156 = vunpack.c.l.b16 %v387
    %v1157 = vunpack.c.h.b16 %v387
    %v1158 = vunpack.c.l.b16 %v388
    %v1159 = vunpack.c.h.b16 %v388
    %v1160 = vunpack.c.l.b16 %v389
    %v1161 = vunpack.c.h.b16 %v389
    %v1162 = vpack.c.b16 %v666, %v662
    %v1163 = vpack.c.b16 %v667, %v663
    %v1164 = vpack.c.b16 %v668, %v664
    %v1165 = vpack.c.b16 %v669, %v665
    %v1166 = vpack.c.b16 %v674, %v670
    %v1167 = vpack.c.b16 %v675, %v671
    %v1168 = vpack.c.b16 %v676, %v672
    %v1169 = vpack.c.b16 %v677, %v673
    %v1170 = vpack.c.b16 %v682, %v678
    %v1171 = vpack.c.b16 %v683, %v679
    %v1172 = vpack.c.b16 %v684, %v680
    %v1173 = vpack.c.b16 %v685, %v681
    %v1174 = vpack.c.b16 %v690, %v686
    %v1175 = vpack.c.b16 %v691, %v687
    %v1176 = vpack.c.b16 %v692, %v688
    %v1177 = vpack.c.b16 %v693, %v689
    %v1178 = vpack.c.b16 %v698, %v694
    %v1179 = vpack.c.b16 %v699, %v695
    %v1180 = vpack.c.b16 %v700, %v696
    %v1181 = vpack.c.b16 %v701, %v697
    %v1182 = vpack.c.b16 %v706, %v702
    %v1183 = vpack.c.b16 %v707, %v703
    %v1184 = vpack.c.b16 %v708, %v704
    %v1185 = vpack.c.b16 %v709, %v705
    %v1186 = vpack.c.b16 %v714, %v710
    %v1187 = vpack.c.b16 %v715, %v711
    %v1188 = vpack.c.b16 %v716, %v712
    %v1189 = vpack.c.b16 %v717, %v713
    %v1190 = vpack.c.b16 %v722, %v718
    %v1191 = vpack.c.b16 %v723, %v719
    %v1192 = vpack.c.b16 %v724, %v720
    %v1193 = vpack.c.b16 %v725, %v721
    %v1194 = vpack.c.b16 %v730, %v726
    %v1195 = vpack.c.b16 %v731, %v727
    %v1196 = vpack.c.b16 %v732, %v728
    %v1197 = vpack.c.b16 %v733, %v729
    %v1198 = vpack.c.b16 %v738, %v734
    %v1199 = vpack.c.b16 %v739, %v735
    %v1200 = vpack.c.b16 %v740, %v736
    %v1201 = vpack.c.b16 %v741, %v737
    %v1202 = vpack.c.b16 %v746, %v742
    %v1203 = vpack.c.b16 %v747, %v743
    %v1204 = vpack.c.b16 %v748, %v744
    %v1205 = vpack.c.b16 %v749, %v745
    %v1206 = vpack.c.b16 %v754, %v750
    %v1207 = vpack.c.b16 %v755, %v751
    %v1208 = vpack.c.b16 %v756, %v752
    %v1209 = vpack.c.b16 %v757, %v753
    %v1210 = vpack.c.b16 %v762, %v758
    %v1211 = vpack.c.b16 %v763, %v759
    %v1212 = vpack.c.b16 %v764, %v760
    %v1213 = vpack.c.b16 %v765, %v761
    %v1214 = vpack.c.b16 %v770, %v766
    %v1215 = vpack.c.b16 %v771, %v767
    %v1216 = vpack.c.b16 %v772, %v768
    %v1217 = vpack.c.b16 %v773, %v769
    %v1218 = vpack.c.b16 %v778, %v774
    %v1219 = vpack.c.b16 %v779, %v775
    %v1220 = vpack.c.b16 %v780, %v776
    %v1221 = vpack.c.b16 %v781, %v777
    %v1222 = vpack.c.b16 %v786, %v782
    %v1223 = vpack.c.b16 %v787, %v783
    %v1224 = vpack.c.b16 %v788, %v784
    %v1225 = vpack.c.b16 %v789, %v785
    %v1226 = vpack.c.b16 %v794, %v790
    %v1227 = vpack.c.b16 %v795, %v791
    %v1228 = vpack.c.b16 %v796, %v792
    %v1229 = vpack.c.b16 %v797, %v793
    %v1230 = vpack.c.b16 %v802, %v798
    %v1231 = vpack.c.b16 %v803, %v799
    %v1232 = vpack.c.b16 %v804, %v800
    %v1233 = vpack.c.b16 %v805, %v801
    %v1234 = vpack.c.b16 %v810, %v806
    %v1235 = vpack.c.b16 %v811, %v807
    %v1236 = vpack.c.b16 %v812, %v808
    %v1237 = vpack.c.b16 %v813, %v809
    %v1238 = vpack.c.b16 %v818, %v814
    %v1239 = vpack.c.b16 %v819, %v815
    %v1240 = vpack.c.b16 %v820, %v816
    %v1241 = vpack.c.b16 %v821, %v817
    %v1242 = vpack.c.b16 %v826, %v822
    %v1243 = vpack.c.b16 %v827, %v823
    %v1244 = vpack.c.b16 %v828, %v824
    %v1245 = vpack.c.b16 %v829, %v825
    %v1246 = vpack.c.b16 %v834, %v830
    %v1247 = vpack.c.b16 %v835, %v831
    %v1248 = vpack.c.b16 %v836, %v832
    %v1249 = vpack.c.b16 %v837, %v833
    %v1250 = vpack.c.b16 %v842, %v838
    %v1251 = vpack.c.b16 %v843, %v839
    %v1252 = vpack.c.b16 %v844, %v840
    %v1253 = vpack.c.b16 %v845, %v841
    %v1254 = vpack.c.b16 %v850, %v846
    %v1255 = vpack.c.b16 %v851, %v847
    %v1256 = vpack.c.b16 %v852, %v848
    %v1257 = vpack.c.b16 %v853, %v849
    %v1258 = vpack.c.b16 %v858, %v854
    %v1259 = vpack.c.b16 %v859, %v855
    %v1260 = vpack.c.b16 %v860, %v856
    %v1261 = vpack.c.b16 %v861, %v857
    %v1262 = vpack.c.b16 %v866, %v862
    %v1263 = vpack.c.b16 %v867, %v863
    %v1264 = vpack.c.b16 %v868, %v864
    %v1265 = vpack.c.b16 %v869, %v865
    %v1266 = vpack.c.b16 %v874, %v870
    %v1267 = vpack.c.b16 %v875, %v871
    %v1268 = vpack.c.b16 %v876, %v872
    %v1269 = vpack.c.b16 %v877, %v873
    %v1270 = vpack.c.b16 %v882, %v878
    %v1271 = vpack.c.b16 %v883, %v879
    %v1272 = vpack.c.b16 %v884, %v880
    %v1273 = vpack.c.b16 %v885, %v881
    %v1274 = vpack.c.b16 %v890, %v886
    %v1275 = vpack.c.b16 %v891, %v887
    %v1276 = vpack.c.b16 %v892, %v888
    %v1277 = vpack.c.b16 %v893, %v889
    %v1278 = vpack.c.b16 %v898, %v894
    %v1279 = vpack.c.b16 %v899, %v895
    %v1280 = vpack.c.b16 %v900, %v896
    %v1281 = vpack.c.b16 %v901, %v897
    %v1282 = vpack.c.b16 %v906, %v902
    %v1283 = vpack.c.b16 %v907, %v903
    %v1284 = vpack.c.b16 %v908, %v904
    %v1285 = vpack.c.b16 %v909, %v905
    %v1286 = vpack.c.b16 %v914, %v910
    %v1287 = vpack.c.b16 %v915, %v911
    %v1288 = vpack.c.b16 %v916, %v912
    %v1289 = vpack.c.b16 %v917, %v913
    %v1290 = vpack.c.b16 %v922, %v918
    %v1291 = vpack.c.b16 %v923, %v919
    %v1292 = vpack.c.b16 %v924, %v920
    %v1293 = vpack.c.b16 %v925, %v921
    %v1294 = vpack.c.b16 %v930, %v926
    %v1295 = vpack.c.b16 %v931, %v927
    %v1296 = vpack.c.b16 %v932, %v928
    %v1297 = vpack.c.b16 %v933, %v929
    %v1298 = vpack.c.b16 %v938, %v934
    %v1299 = vpack.c.b16 %v939, %v935
    %v1300 = vpack.c.b16 %v940, %v936
    %v1301 = vpack.c.b16 %v941, %v937
    %v1302 = vpack.c.b16 %v946, %v942
    %v1303 = vpack.c.b16 %v947, %v943
    %v1304 = vpack.c.b16 %v948, %v944
    %v1305 = vpack.c.b16 %v949, %v945
    %v1306 = vpack.c.b16 %v954, %v950
    %v1307 = vpack.c.b16 %v955, %v951
    %v1308 = vpack.c.b16 %v956, %v952
    %v1309 = vpack.c.b16 %v957, %v953
    %v1310 = vpack.c.b16 %v962, %v958
    %v1311 = vpack.c.b16 %v963, %v959
    %v1312 = vpack.c.b16 %v964, %v960
    %v1313 = vpack.c.b16 %v965, %v961
    %v1314 = vpack.c.b16 %v970, %v966
    %v1315 = vpack.c.b16 %v971, %v967
    %v1316 = vpack.c.b16 %v972, %v968
    %v1317 = vpack.c.b16 %v973, %v969
    %v1318 = vpack.c.b16 %v978, %v974
    %v1319 = vpack.c.b16 %v979, %v975
    %v1320 = vpack.c.b16 %v980, %v976
    %v1321 = vpack.c.b16 %v981, %v977
    %v1322 = vpack.c.b16 %v986, %v982
    %v1323 = vpack.c.b16 %v987, %v983
    %v1324 = vpack.c.b16 %v988, %v984
    %v1325 = vpack.c.b16 %v989, %v985
    %v1326 = vpack.c.b16 %v994, %v990
    %v1327 = vpack.c.b16 %v995, %v991
    %v1328 = vpack.c.b16 %v996, %v992
    %v1329 = vpack.c.b16 %v997, %v993
    %v1330 = vpack.c.b16 %v1002, %v998
    %v1331 = vpack.c.b16 %v1003, %v999
    %v1332 = vpack.c.b16 %v1004, %v1000
    %v1333 = vpack.c.b16 %v1005, %v1001
    %v1334 = vpack.c.b16 %v1010, %v1006
    %v1335 = vpack.c.b16 %v1011, %v1007
    %v1336 = vpack.c.b16 %v1012, %v1008
    %v1337 = vpack.c.b16 %v1013, %v1009
    %v1338 = vpack.c.b16 %v1018, %v1014
    %v1339 = vpack.c.b16 %v1019, %v1015
    %v1340 = vpack.c.b16 %v1020, %v1016
    %v1341 = vpack.c.b16 %v1021, %v1017
    %v1342 = vpack.c.b16 %v1026, %v1022
    %v1343 = vpack.c.b16 %v1027, %v1023
    %v1344 = vpack.c.b16 %v1028, %v1024
    %v1345 = vpack.c.b16 %v1029, %v1025
    %v1346 = vpack.c.b16 %v1034, %v1030
    %v1347 = vpack.c.b16 %v1035, %v1031
    %v1348 = vpack.c.b16 %v1036, %v1032
    %v1349 = vpack.c.b16 %v1037, %v1033
    %v1350 = vpack.c.b16 %v1042, %v1038
    %v1351 = vpack.c.b16 %v1043, %v1039
    %v1352 = vpack.c.b16 %v1044, %v1040
    %v1353 = vpack.c.b16 %v1045, %v1041
    %v1354 = vpack.c.b16 %v1050, %v1046
    %v1355 = vpack.c.b16 %v1051, %v1047
    %v1356 = vpack.c.b16 %v1052, %v1048
    %v1357 = vpack.c.b16 %v1053, %v1049
    %v1358 = vpack.c.b16 %v1058, %v1054
    %v1359 = vpack.c.b16 %v1059, %v1055
    %v1360 = vpack.c.b16 %v1060, %v1056
    %v1361 = vpack.c.b16 %v1061, %v1057
    %v1362 = vpack.c.b16 %v1066, %v1062
    %v1363 = vpack.c.b16 %v1067, %v1063
    %v1364 = vpack.c.b16 %v1068, %v1064
    %v1365 = vpack.c.b16 %v1069, %v1065
    %v1366 = vpack.c.b16 %v1074, %v1070
    %v1367 = vpack.c.b16 %v1075, %v1071
    %v1368 = vpack.c.b16 %v1076, %v1072
    %v1369 = vpack.c.b16 %v1077, %v1073
    %v1370 = vpack.c.b16 %v1082, %v1078
    %v1371 = vpack.c.b16 %v1083, %v1079
    %v1372 = vpack.c.b16 %v1084, %v1080
    %v1373 = vpack.c.b16 %v1085, %v1081
    %v1374 = vpack.c.b16 %v1090, %v1086
    %v1375 = vpack.c.b16 %v1091, %v1087
    %v1376 = vpack.c.b16 %v1092, %v1088
    %v1377 = vpack.c.b16 %v1093, %v1089
    %v1378 = vpack.c.b16 %v1098, %v1094
    %v1379 = vpack.c.b16 %v1099, %v1095
    %v1380 = vpack.c.b16 %v1100, %v1096
    %v1381 = vpack.c.b16 %v1101, %v1097
    %v1382 = vpack.c.b16 %v1106, %v1102
    %v1383 = vpack.c.b16 %v1107, %v1103
    %v1384 = vpack.c.b16 %v1108, %v1104
    %v1385 = vpack.c.b16 %v1109, %v1105
    %v1386 = vpack.c.b16 %v1114, %v1110
    %v1387 = vpack.c.b16 %v1115, %v1111
    %v1388 = vpack.c.b16 %v1116, %v1112
    %v1389 = vpack.c.b16 %v1117, %v1113
    %v1390 = vpack.c.b16 %v1122, %v1118
    %v1391 = vpack.c.b16 %v1123, %v1119
    %v1392 = vpack.c.b16 %v1124, %v1120
    %v1393 = vpack.c.b16 %v1125, %v1121
    %v1394 = vpack.c.b16 %v1130, %v1126
    %v1395 = vpack.c.b16 %v1131, %v1127
    %v1396 = vpack.c.b16 %v1132, %v1128
    %v1397 = vpack.c.b16 %v1133, %v1129
    %v1398 = vpack.c.b16 %v1138, %v1134
    %v1399 = vpack.c.b16 %v1139, %v1135
    %v1400 = vpack.c.b16 %v1140, %v1136
    %v1401 = vpack.c.b16 %v1141, %v1137
    %v1402 = vpack.c.b16 %v1146, %v1142
    %v1403 = vpack.c.b16 %v1147, %v1143
    %v1404 = vpack.c.b16 %v1148, %v1144
    %v1405 = vpack.c.b16 %v1149, %v1145
    %v1406 = vpack.c.b16 %v1154, %v1150
    %v1407 = vpack.c.b16 %v1155, %v1151
    %v1408 = vpack.c.b16 %v1156, %v1152
    %v1409 = vpack.c.b16 %v1157, %v1153
    %v1410 = vpack.c.b16 %v1158, %v1158
    %v1411 = vpack.c.b16 %v1159, %v1159
    %v1412 = vpack.c.b16 %v1160, %v1160
    %v1413 = vpack.c.b16 %v1161, %v1161
    %vm1662 = vcmask 850944
    %v1664 = vsel %vm1662, %v139, 0
    %vm1666 = vcmask 1043456
    %v1668 = vsel %vm1666, %v1410, 0
    %v1671 = vsel %vm1666, %v1411, 0
    %v1674 = vsel %vm1666, %v1412, 0
    %v1677 = vsel %vm1666, %v1413, 0
    %1679 = vmatprep.subr.bf16.mxu0 %v1163
    %1680 = vmatpush1.bf16.msra.mxu0 %v1162
    %1681 = vmatprep.subr.bf16.mxu0 %v1167
    %1682 = vmatpush1.bf16.msra.mxu0 %v1166
    %1683 = vmatprep.subr.bf16.mxu0 %v1171
    %1684 = vmatpush1.bf16.msra.mxu0 %v1170
    %1685 = vmatprep.subr.bf16.mxu0 %v1175
    %1686 = vmatpush1.bf16.msra.mxu0 %v1174
    %1687 = vmatprep.subr.bf16.mxu0 %v1179
    %1688 = vmatpush1.bf16.msra.mxu0 %v1178
    %1689 = vmatprep.subr.bf16.mxu0 %v1183
    %1690 = vmatpush1.bf16.msra.mxu0 %v1182
    %1691 = vmatprep.subr.bf16.mxu0 %v1187
    %1692 = vmatpush1.bf16.msra.mxu0 %v1186
    %1693 = vmatprep.subr.bf16.mxu0 %v1191
    %1694 = vmatpush1.bf16.msra.mxu0 %v1190
    %1695 = vmatprep.subr.bf16.mxu0 %v1195
    %1696 = vmatpush1.bf16.msra.mxu0 %v1194
    %1697 = vmatprep.subr.bf16.mxu0 %v1199
    %1698 = vmatpush1.bf16.msra.mxu0 %v1198
    %1699 = vmatprep.subr.bf16.mxu0 %v1203
    %1700 = vmatpush1.bf16.msra.mxu0 %v1202
    %1701 = vmatprep.subr.bf16.mxu0 %v1207
    %1702 = vmatpush1.bf16.msra.mxu0 %v1206
    %1703 = vmatprep.subr.bf16.mxu0 %v1211
    %1704 = vmatpush1.bf16.msra.mxu0 %v1210
    %1705 = vmatprep.subr.bf16.mxu0 %v1215
    %1706 = vmatpush1.bf16.msra.mxu0 %v1214
    %1707 = vmatprep.subr.bf16.mxu0 %v1219
    %1708 = vmatpush1.bf16.msra.mxu0 %v1218
    %1709 = vmatprep.subr.bf16.mxu0 %v1223
    %1710 = vmatpush1.bf16.msra.mxu0 %v1222
    %1711 = vmatprep.mubr.bf16.mxu0 %v133
    %1712 = vmatmul.mubr.bf16.gmra.mrb[0].mxu0 %v132
    %v1713 = vpop.f32.mrb[0].mxu0
    %v1714 = vadd.f32 %v395, %v1713
    %v1715 = vpop.f32.mrb[0].mxu0
    %v1716 = vadd.f32 %v399, %v1715
    %v1717 = vpop.f32.mrb[0].mxu0
    %v1718 = vpop.f32.mrb[0].mxu0
    %1719 = vdwg.mxu0
    %1720 = vmatprep.subr.bf16.mxu0 %v1227
    %1721 = vmatpush1.bf16.msra.mxu0 %v1226
    %1722 = vmatprep.subr.bf16.mxu0 %v1231
    %1723 = vmatpush1.bf16.msra.mxu0 %v1230
    %1724 = vmatprep.subr.bf16.mxu0 %v1235
    %1725 = vmatpush1.bf16.msra.mxu0 %v1234
    %1726 = vmatprep.subr.bf16.mxu0 %v1239
    %1727 = vmatpush1.bf16.msra.mxu0 %v1238
    %1728 = vmatprep.subr.bf16.mxu0 %v1243
    %1729 = vmatpush1.bf16.msra.mxu0 %v1242
    %1730 = vmatprep.subr.bf16.mxu0 %v1247
    %1731 = vmatpush1.bf16.msra.mxu0 %v1246
    %1732 = vmatprep.subr.bf16.mxu0 %v1251
    %1733 = vmatpush1.bf16.msra.mxu0 %v1250
    %1734 = vmatprep.subr.bf16.mxu0 %v1255
    %1735 = vmatpush1.bf16.msra.mxu0 %v1254
    %1736 = vmatprep.subr.bf16.mxu0 %v1259
    %1737 = vmatpush1.bf16.msra.mxu0 %v1258
    %1738 = vmatprep.subr.bf16.mxu0 %v1263
    %1739 = vmatpush1.bf16.msra.mxu0 %v1262
    %1740 = vmatprep.subr.bf16.mxu0 %v1267
    %1741 = vmatpush1.bf16.msra.mxu0 %v1266
    %1742 = vmatprep.subr.bf16.mxu0 %v1271
    %1743 = vmatpush1.bf16.msra.mxu0 %v1270
    %1744 = vmatprep.subr.bf16.mxu0 %v1275
    %1745 = vmatpush1.bf16.msra.mxu0 %v1274
    %1746 = vmatprep.subr.bf16.mxu0 %v1279
    %1747 = vmatpush1.bf16.msra.mxu0 %v1278
    %1748 = vmatprep.subr.bf16.mxu0 %v1283
    %1749 = vmatpush1.bf16.msra.mxu0 %v1282
    %1750 = vmatprep.subr.bf16.mxu0 %v1287
    %1751 = vmatpush1.bf16.msra.mxu0 %v1286
    %1752 = vmatprep.mubr.bf16.mxu0 %v135
    %1753 = vmatmul.mubr.bf16.gmra.mrb[0].mxu0 %v134
    %v1754 = vpop.f32.mrb[0].mxu0
    %v1755 = vadd.f32 %v1714, %v1754
    %v1756 = vpop.f32.mrb[0].mxu0
    %v1757 = vadd.f32 %v1716, %v1756
    %v1758 = vpop.f32.mrb[0].mxu0
    %v1759 = vpop.f32.mrb[0].mxu0
    %1760 = vdwg.mxu0
    %1761 = vmatprep.subr.bf16.mxu0 %v1291
    %1762 = vmatpush1.bf16.msra.mxu0 %v1290
    %1763 = vmatprep.subr.bf16.mxu0 %v1295
    %1764 = vmatpush1.bf16.msra.mxu0 %v1294
    %1765 = vmatprep.subr.bf16.mxu0 %v1299
    %1766 = vmatpush1.bf16.msra.mxu0 %v1298
    %1767 = vmatprep.subr.bf16.mxu0 %v1303
    %1768 = vmatpush1.bf16.msra.mxu0 %v1302
    %1769 = vmatprep.subr.bf16.mxu0 %v1307
    %1770 = vmatpush1.bf16.msra.mxu0 %v1306
    %1771 = vmatprep.subr.bf16.mxu0 %v1311
    %1772 = vmatpush1.bf16.msra.mxu0 %v1310
    %1773 = vmatprep.subr.bf16.mxu0 %v1315
    %1774 = vmatpush1.bf16.msra.mxu0 %v1314
    %1775 = vmatprep.subr.bf16.mxu0 %v1319
    %1776 = vmatpush1.bf16.msra.mxu0 %v1318
    %1777 = vmatprep.subr.bf16.mxu0 %v1323
    %1778 = vmatpush1.bf16.msra.mxu0 %v1322
    %1779 = vmatprep.subr.bf16.mxu0 %v1327
    %1780 = vmatpush1.bf16.msra.mxu0 %v1326
    %1781 = vmatprep.subr.bf16.mxu0 %v1331
    %1782 = vmatpush1.bf16.msra.mxu0 %v1330
    %1783 = vmatprep.subr.bf16.mxu0 %v1335
    %1784 = vmatpush1.bf16.msra.mxu0 %v1334
    %1785 = vmatprep.subr.bf16.mxu0 %v1339
    %1786 = vmatpush1.bf16.msra.mxu0 %v1338
    %1787 = vmatprep.subr.bf16.mxu0 %v1343
    %1788 = vmatpush1.bf16.msra.mxu0 %v1342
    %1789 = vmatprep.subr.bf16.mxu0 %v1347
    %1790 = vmatpush1.bf16.msra.mxu0 %v1346
    %1791 = vmatprep.subr.bf16.mxu0 %v1351
    %1792 = vmatpush1.bf16.msra.mxu0 %v1350
    %1793 = vmatprep.mubr.bf16.mxu0 %v137
    %1794 = vmatmul.mubr.bf16.gmra.mrb[0].mxu0 %v136
    %v1795 = vpop.f32.mrb[0].mxu0
    %v1796 = vadd.f32 %v1755, %v1795
    %v1797 = vpop.f32.mrb[0].mxu0
    %v1798 = vadd.f32 %v1757, %v1797
    %v1799 = vpop.f32.mrb[0].mxu0
    %v1800 = vpop.f32.mrb[0].mxu0
    %1801 = vdwg.mxu0
    %1802 = vmatprep.subr.bf16.mxu0 %v1355
    %1803 = vmatpush1.bf16.msra.mxu0 %v1354
    %1804 = vmatprep.subr.bf16.mxu0 %v1359
    %1805 = vmatpush1.bf16.msra.mxu0 %v1358
    %1806 = vmatprep.subr.bf16.mxu0 %v1363
    %1807 = vmatpush1.bf16.msra.mxu0 %v1362
    %1808 = vmatprep.subr.bf16.mxu0 %v1367
    %1809 = vmatpush1.bf16.msra.mxu0 %v1366
    %1810 = vmatprep.subr.bf16.mxu0 %v1371
    %1811 = vmatpush1.bf16.msra.mxu0 %v1370
    %1812 = vmatprep.subr.bf16.mxu0 %v1375
    %1813 = vmatpush1.bf16.msra.mxu0 %v1374
    %1814 = vmatprep.subr.bf16.mxu0 %v1379
    %1815 = vmatpush1.bf16.msra.mxu0 %v1378
    %1816 = vmatprep.subr.bf16.mxu0 %v1383
    %1817 = vmatpush1.bf16.msra.mxu0 %v1382
    %1818 = vmatprep.subr.bf16.mxu0 %v1387
    %1819 = vmatpush1.bf16.msra.mxu0 %v1386
    %1820 = vmatprep.subr.bf16.mxu0 %v1391
    %1821 = vmatpush1.bf16.msra.mxu0 %v1390
    %1822 = vmatprep.subr.bf16.mxu0 %v1395
    %1823 = vmatpush1.bf16.msra.mxu0 %v1394
    %1824 = vmatprep.subr.bf16.mxu0 %v1399
    %1825 = vmatpush1.bf16.msra.mxu0 %v1398
    %1826 = vmatprep.subr.bf16.mxu0 %v1403
    %1827 = vmatpush1.bf16.msra.mxu0 %v1402
    %1828 = vmatprep.subr.bf16.mxu0 %v1407
    %1829 = vmatpush1.bf16.msra.mxu0 %v1406
    %1830 = vmatprep.subr.bf16.mxu0 %v1671
    %1831 = vmatpush1.bf16.msra.mxu0 %v1668
    %1832 = vmatprep.subr.bf16.mxu0 0
    %1833 = vmatpush1.bf16.msra.mxu0 0
    %1834 = vmatprep.mubr.bf16.mxu0 %v1664
    %1835 = vmatmul.mubr.bf16.gmra.mrb[0].mxu0 %v138
    %v1836 = vpop.f32.mrb[0].mxu0
    %v1837 = vadd.f32 %v1796, %v1836
    %v1838 = vpop.f32.mrb[0].mxu0
    %v1839 = vadd.f32 %v1798, %v1838
    %v1840 = vpop.f32.mrb[0].mxu0
    %v1841 = vpop.f32.mrb[0].mxu0
    %1842 = vdwg.mxu0
    %1843 = vmatprep.subr.bf16.mxu0 %v1165
    %1844 = vmatpush1.bf16.msra.mxu0 %v1164
    %1845 = vmatprep.subr.bf16.mxu0 %v1169
    %1846 = vmatpush1.bf16.msra.mxu0 %v1168
    %1847 = vmatprep.subr.bf16.mxu0 %v1173
    %1848 = vmatpush1.bf16.msra.mxu0 %v1172
    %1849 = vmatprep.subr.bf16.mxu0 %v1177
    %1850 = vmatpush1.bf16.msra.mxu0 %v1176
    %1851 = vmatprep.subr.bf16.mxu0 %v1181
    %1852 = vmatpush1.bf16.msra.mxu0 %v1180
    %1853 = vmatprep.subr.bf16.mxu0 %v1185
    %1854 = vmatpush1.bf16.msra.mxu0 %v1184
    %1855 = vmatprep.subr.bf16.mxu0 %v1189
    %1856 = vmatpush1.bf16.msra.mxu0 %v1188
    %1857 = vmatprep.subr.bf16.mxu0 %v1193
    %1858 = vmatpush1.bf16.msra.mxu0 %v1192
    %1859 = vmatprep.subr.bf16.mxu0 %v1197
    %1860 = vmatpush1.bf16.msra.mxu0 %v1196
    %1861 = vmatprep.subr.bf16.mxu0 %v1201
    %1862 = vmatpush1.bf16.msra.mxu0 %v1200
    %1863 = vmatprep.subr.bf16.mxu0 %v1205
    %1864 = vmatpush1.bf16.msra.mxu0 %v1204
    %1865 = vmatprep.subr.bf16.mxu0 %v1209
    %1866 = vmatpush1.bf16.msra.mxu0 %v1208
    %1867 = vmatprep.subr.bf16.mxu0 %v1213
    %1868 = vmatpush1.bf16.msra.mxu0 %v1212
    %1869 = vmatprep.subr.bf16.mxu0 %v1217
    %1870 = vmatpush1.bf16.msra.mxu0 %v1216
    %1871 = vmatprep.subr.bf16.mxu0 %v1221
    %1872 = vmatpush1.bf16.msra.mxu0 %v1220
    %1873 = vmatprep.subr.bf16.mxu0 %v1225
    %1874 = vmatpush1.bf16.msra.mxu0 %v1224
    %1875 = vmatprep.mubr.bf16.mxu0 %v133
    %1876 = vmatmul.mubr.bf16.gmra.mrb[0].mxu0 %v132
    %v1877 = vpop.f32.mrb[0].mxu0
    %v1878 = vadd.f32 %v403, %v1877
    %v1879 = vpop.f32.mrb[0].mxu0
    %v1880 = vadd.f32 %v407, %v1879
    %v1881 = vpop.f32.mrb[0].mxu0
    %v1882 = vpop.f32.mrb[0].mxu0
    %1883 = vdwg.mxu0
    %1884 = vmatprep.subr.bf16.mxu0 %v1229
    %1885 = vmatpush1.bf16.msra.mxu0 %v1228
    %1886 = vmatprep.subr.bf16.mxu0 %v1233
    %1887 = vmatpush1.bf16.msra.mxu0 %v1232
    %1888 = vmatprep.subr.bf16.mxu0 %v1237
    %1889 = vmatpush1.bf16.msra.mxu0 %v1236
    %1890 = vmatprep.subr.bf16.mxu0 %v1241
    %1891 = vmatpush1.bf16.msra.mxu0 %v1240
    %1892 = vmatprep.subr.bf16.mxu0 %v1245
    %1893 = vmatpush1.bf16.msra.mxu0 %v1244
    %1894 = vmatprep.subr.bf16.mxu0 %v1249
    %1895 = vmatpush1.bf16.msra.mxu0 %v1248
    %1896 = vmatprep.subr.bf16.mxu0 %v1253
    %1897 = vmatpush1.bf16.msra.mxu0 %v1252
    %1898 = vmatprep.subr.bf16.mxu0 %v1257
    %1899 = vmatpush1.bf16.msra.mxu0 %v1256
    %1900 = vmatprep.subr.bf16.mxu0 %v1261
    %1901 = vmatpush1.bf16.msra.mxu0 %v1260
    %1902 = vmatprep.subr.bf16.mxu0 %v1265
    %1903 = vmatpush1.bf16.msra.mxu0 %v1264
    %1904 = vmatprep.subr.bf16.mxu0 %v1269
    %1905 = vmatpush1.bf16.msra.mxu0 %v1268
    %1906 = vmatprep.subr.bf16.mxu0 %v1273
    %1907 = vmatpush1.bf16.msra.mxu0 %v1272
    %1908 = vmatprep.subr.bf16.mxu0 %v1277
    %1909 = vmatpush1.bf16.msra.mxu0 %v1276
    %1910 = vmatprep.subr.bf16.mxu0 %v1281
    %1911 = vmatpush1.bf16.msra.mxu0 %v1280
    %1912 = vmatprep.subr.bf16.mxu0 %v1285
    %1913 = vmatpush1.bf16.msra.mxu0 %v1284
    %1914 = vmatprep.subr.bf16.mxu0 %v1289
    %1915 = vmatpush1.bf16.msra.mxu0 %v1288
    %1916 = vmatprep.mubr.bf16.mxu0 %v135
    %1917 = vmatmul.mubr.bf16.gmra.mrb[0].mxu0 %v134
    %v1918 = vpop.f32.mrb[0].mxu0
    %v1919 = vadd.f32 %v1878, %v1918
    %v1920 = vpop.f32.mrb[0].mxu0
    %v1921 = vadd.f32 %v1880, %v1920
    %v1922 = vpop.f32.mrb[0].mxu0
    %v1923 = vpop.f32.mrb[0].mxu0
    %1924 = vdwg.mxu0
    %1925 = vmatprep.subr.bf16.mxu0 %v1293
    %1926 = vmatpush1.bf16.msra.mxu0 %v1292
    %1927 = vmatprep.subr.bf16.mxu0 %v1297
    %1928 = vmatpush1.bf16.msra.mxu0 %v1296
    %1929 = vmatprep.subr.bf16.mxu0 %v1301
    %1930 = vmatpush1.bf16.msra.mxu0 %v1300
    %1931 = vmatprep.subr.bf16.mxu0 %v1305
    %1932 = vmatpush1.bf16.msra.mxu0 %v1304
    %1933 = vmatprep.subr.bf16.mxu0 %v1309
    %1934 = vmatpush1.bf16.msra.mxu0 %v1308
    %1935 = vmatprep.subr.bf16.mxu0 %v1313
    %1936 = vmatpush1.bf16.msra.mxu0 %v1312
    %1937 = vmatprep.subr.bf16.mxu0 %v1317
    %1938 = vmatpush1.bf16.msra.mxu0 %v1316
    %1939 = vmatprep.subr.bf16.mxu0 %v1321
    %1940 = vmatpush1.bf16.msra.mxu0 %v1320
    %1941 = vmatprep.subr.bf16.mxu0 %v1325
    %1942 = vmatpush1.bf16.msra.mxu0 %v1324
    %1943 = vmatprep.subr.bf16.mxu0 %v1329
    %1944 = vmatpush1.bf16.msra.mxu0 %v1328
    %1945 = vmatprep.subr.bf16.mxu0 %v1333
    %1946 = vmatpush1.bf16.msra.mxu0 %v1332
    %1947 = vmatprep.subr.bf16.mxu0 %v1337
    %1948 = vmatpush1.bf16.msra.mxu0 %v1336
    %1949 = vmatprep.subr.bf16.mxu0 %v1341
    %1950 = vmatpush1.bf16.msra.mxu0 %v1340
    %1951 = vmatprep.subr.bf16.mxu0 %v1345
    %1952 = vmatpush1.bf16.msra.mxu0 %v1344
    %1953 = vmatprep.subr.bf16.mxu0 %v1349
    %1954 = vmatpush1.bf16.msra.mxu0 %v1348
    %1955 = vmatprep.subr.bf16.mxu0 %v1353
    %1956 = vmatpush1.bf16.msra.mxu0 %v1352
    %1957 = vmatprep.mubr.bf16.mxu0 %v137
    %1958 = vmatmul.mubr.bf16.gmra.mrb[0].mxu0 %v136
    %v1959 = vpop.f32.mrb[0].mxu0
    %v1960 = vadd.f32 %v1919, %v1959
    %v1961 = vpop.f32.mrb[0].mxu0
    %v1962 = vadd.f32 %v1921, %v1961
    %v1963 = vpop.f32.mrb[0].mxu0
    %v1964 = vpop.f32.mrb[0].mxu0
    %1965 = vdwg.mxu0
    %1966 = vmatprep.subr.bf16.mxu0 %v1357
    %1967 = vmatpush1.bf16.msra.mxu0 %v1356
    %1968 = vmatprep.subr.bf16.mxu0 %v1361
    %1969 = vmatpush1.bf16.msra.mxu0 %v1360
    %1970 = vmatprep.subr.bf16.mxu0 %v1365
    %1971 = vmatpush1.bf16.msra.mxu0 %v1364
    %1972 = vmatprep.subr.bf16.mxu0 %v1369
    %1973 = vmatpush1.bf16.msra.mxu0 %v1368
    %1974 = vmatprep.subr.bf16.mxu0 %v1373
    %1975 = vmatpush1.bf16.msra.mxu0 %v1372
    %1976 = vmatprep.subr.bf16.mxu0 %v1377
    %1977 = vmatpush1.bf16.msra.mxu0 %v1376
    %1978 = vmatprep.subr.bf16.mxu0 %v1381
    %1979 = vmatpush1.bf16.msra.mxu0 %v1380
    %1980 = vmatprep.subr.bf16.mxu0 %v1385
    %1981 = vmatpush1.bf16.msra.mxu0 %v1384
    %1982 = vmatprep.subr.bf16.mxu0 %v1389
    %1983 = vmatpush1.bf16.msra.mxu0 %v1388
    %1984 = vmatprep.subr.bf16.mxu0 %v1393
    %1985 = vmatpush1.bf16.msra.mxu0 %v1392
    %1986 = vmatprep.subr.bf16.mxu0 %v1397
    %1987 = vmatpush1.bf16.msra.mxu0 %v1396
    %1988 = vmatprep.subr.bf16.mxu0 %v1401
    %1989 = vmatpush1.bf16.msra.mxu0 %v1400
    %1990 = vmatprep.subr.bf16.mxu0 %v1405
    %1991 = vmatpush1.bf16.msra.mxu0 %v1404
    %1992 = vmatprep.subr.bf16.mxu0 %v1409
    %1993 = vmatpush1.bf16.msra.mxu0 %v1408
    %1994 = vmatprep.subr.bf16.mxu0 %v1677
    %1995 = vmatpush1.bf16.msra.mxu0 %v1674
    %1996 = vmatprep.subr.bf16.mxu0 0
    %1997 = vmatpush1.bf16.msra.mxu0 0
    %1998 = vmatprep.mubr.bf16.mxu0 %v1664
    %1999 = vmatmul.mubr.bf16.gmra.mrb[0].mxu0 %v138
    %v2000 = vpop.f32.mrb[0].mxu0
    %v2001 = vadd.f32 %v1960, %v2000
    %v2002 = vpop.f32.mrb[0].mxu0
    %v2003 = vadd.f32 %v1962, %v2002
    %v2004 = vpop.f32.mrb[0].mxu0
    %v2005 = vpop.f32.mrb[0].mxu0
    %2006 = vdwg.mxu0
    %v2007 = vmul.f32 %v1837, 0.1
    %v2008 = vmul.f32 %v1839, 0.1
    %v2009 = vmul.f32 %v2001, 0.1
    %v2010 = vmul.f32 %v2003, 0.1
    %v2011 = vmax.f32 %v1837, %v2007
    %v2012 = vmax.f32 %v1839, %v2008
    %v2013 = vmax.f32 %v2001, %v2009
    %v2014 = vmax.f32 %v2003, %v2010
    %v2015 = vpack.c.bf16 %v2011, %v2011
    %v2016 = vpack.c.bf16 %v2012, %v2012
    %v2017 = vpack.c.bf16 %v2013, %v2013
    %v2018 = vpack.c.bf16 %v2014, %v2014
    %v2019 = vld [vmem:[%s3] sm:$0xff]
    %v2020 = vld [vmem:[%s3 + $0x8] sm:$0xff]
    %v2021 = vld [vmem:[%s3 + $0x10] sm:$0xff]
    %v2022 = vld [vmem:[%s3 + $0x18] sm:$0xff]
    %v2023 = vld [vmem:[%s3 + $0x20] sm:$0xff]
    %v2024 = vld [vmem:[%s3 + $0x28] sm:$0xff]
    %v2025 = vld [vmem:[%s3 + $0x30] sm:$0xff]
    %v2026 = vld [vmem:[%s3 + $0x38] sm:$0xff]
    %v2027 = vld [vmem:[%s3 + $0x40] sm:$0xff]
    %v2028 = vld [vmem:[%s3 + $0x48] sm:$0xff]
    %v2029 = vld [vmem:[%s3 + $0x50] sm:$0xff]
    %v2030 = vld [vmem:[%s3 + $0x58] sm:$0xff]
    %v2031 = vld [vmem:[%s3 + $0x60] sm:$0xff]
    %v2032 = vld [vmem:[%s3 + $0x68] sm:$0xff]
    %v2033 = vld [vmem:[%s3 + $0x70] sm:$0xff]
    %v2034 = vld [vmem:[%s3 + $0x78] sm:$0xff]
    %v2035 = vld [vmem:[%s3 + $0x80] sm:$0xff]
    %v2036 = vld [vmem:[%s3 + $0x88] sm:$0xff]
    %v2037 = vld [vmem:[%s3 + $0x90] sm:$0xff]
    %v2038 = vld [vmem:[%s3 + $0x98] sm:$0xff]
    %v2039 = vld [vmem:[%s3 + $0xa0] sm:$0xff]
    %v2040 = vld [vmem:[%s3 + $0xa8] sm:$0xff]
    %v2041 = vld [vmem:[%s3 + $0xb0] sm:$0xff]
    %v2042 = vld [vmem:[%s3 + $0xb8] sm:$0xff]
    %v2043 = vld [vmem:[%s3 + $0xc0] sm:$0xff]
    %v2044 = vld [vmem:[%s3 + $0xc8] sm:$0xff]
    %v2045 = vld [vmem:[%s3 + $0xd0] sm:$0xff]
    %v2046 = vld [vmem:[%s3 + $0xd8] sm:$0xff]
    %v2047 = vld [vmem:[%s3 + $0xe0] sm:$0xff]
    %v2048 = vld [vmem:[%s3 + $0xe8] sm:$0xff]
    %v2049 = vld [vmem:[%s3 + $0xf0] sm:$0xff]
    %v2050 = vld [vmem:[%s3 + $0xf8] sm:$0xff]
    %v2051 = vld [vmem:[%s3 + $0x100] sm:$0xff]
    %v2052 = vld [vmem:[%s3 + $0x108] sm:$0xff]
    %v2053 = vld [vmem:[%s3 + $0x110] sm:$0xff]
    %v2054 = vld [vmem:[%s3 + $0x118] sm:$0xff]
    %v2055 = vld [vmem:[%s3 + $0x120] sm:$0xff]
    %v2056 = vld [vmem:[%s3 + $0x128] sm:$0xff]
    %v2057 = vld [vmem:[%s3 + $0x130] sm:$0xff]
    %v2058 = vld [vmem:[%s3 + $0x138] sm:$0xff]
    %v2059 = vld [vmem:[%s3 + $0x140] sm:$0xff]
    %v2060 = vld [vmem:[%s3 + $0x148] sm:$0xff]
    %v2061 = vld [vmem:[%s3 + $0x150] sm:$0xff]
    %v2062 = vld [vmem:[%s3 + $0x158] sm:$0xff]
    %v2063 = vld [vmem:[%s3 + $0x160] sm:$0xff]
    %v2064 = vld [vmem:[%s3 + $0x168] sm:$0xff]
    %v2065 = vld [vmem:[%s3 + $0x170] sm:$0xff]
    %v2066 = vld [vmem:[%s3 + $0x178] sm:$0xff]
    %v2067 = vld [vmem:[%s3 + $0x180] sm:$0xff]
    %v2068 = vld [vmem:[%s3 + $0x188] sm:$0xff]
    %v2069 = vld [vmem:[%s3 + $0x190] sm:$0xff]
    %v2070 = vld [vmem:[%s3 + $0x198] sm:$0xff]
    %v2071 = vld [vmem:[%s3 + $0x1a0] sm:$0xff]
    %v2072 = vld [vmem:[%s3 + $0x1a8] sm:$0xff]
    %v2073 = vld [vmem:[%s3 + $0x1b0] sm:$0xff]
    %v2074 = vld [vmem:[%s3 + $0x1b8] sm:$0xff]
    %v2075 = vld [vmem:[%s3 + $0x1c0] sm:$0xff]
    %v2076 = vld [vmem:[%s3 + $0x1c8] sm:$0xff]
    %v2077 = vld [vmem:[%s3 + $0x1d0] sm:$0xff]
    %v2078 = vld [vmem:[%s3 + $0x1d8] sm:$0xff]
    %v2079 = vld [vmem:[%s3 + $0x1e0] sm:$0xff]
    %v2080 = vld [vmem:[%s3 + $0x1e8] sm:$0xff]
    %v2081 = vld [vmem:[%s3 + $0x1f0] sm:$0xff]
    %v2082 = vld [vmem:[%s3 + $0x1f8] sm:$0xff]
    %v2083 = vld [vmem:[%s4] sm:$0x3]
    %v2085 = vlaneseq
    %v2086 = vshrl.u32 %v2085, 7
    %v2087 = vsub.s32 0, %v2086
    %v2088 = vrot.slane %v2083, %v2087
    %v2089 = vlaneseq
    %v2090 = vshrl.u32 %v2089, 7
    %v2091 = vsub.s32 1, %v2090
    %v2092 = vrot.slane %v2083, %v2091
    %v2159 = vunpack.c.l.b16 %v2019
    %v2160 = vunpack.c.h.b16 %v2019
    %v2161 = vunpack.c.l.b16 %v2020
    %v2162 = vunpack.c.h.b16 %v2020
    %v2163 = vunpack.c.l.b16 %v2021
    %v2164 = vunpack.c.h.b16 %v2021
    %v2165 = vunpack.c.l.b16 %v2022
    %v2166 = vunpack.c.h.b16 %v2022
    %v2167 = vunpack.c.l.b16 %v2023
    %v2168 = vunpack.c.h.b16 %v2023
    %v2169 = vunpack.c.l.b16 %v2024
    %v2170 = vunpack.c.h.b16 %v2024
    %v2171 = vunpack.c.l.b16 %v2025
    %v2172 = vunpack.c.h.b16 %v2025
    %v2173 = vunpack.c.l.b16 %v2026
    %v2174 = vunpack.c.h.b16 %v2026
    %v2175 = vunpack.c.l.b16 %v2027
    %v2176 = vunpack.c.h.b16 %v2027
    %v2177 = vunpack.c.l.b16 %v2028
    %v2178 = vunpack.c.h.b16 %v2028
    %v2179 = vunpack.c.l.b16 %v2029
    %v2180 = vunpack.c.h.b16 %v2029
    %v2181 = vunpack.c.l.b16 %v2030
    %v2182 = vunpack.c.h.b16 %v2030
    %v2183 = vunpack.c.l.b16 %v2031
    %v2184 = vunpack.c.h.b16 %v2031
    %v2185 = vunpack.c.l.b16 %v2032
    %v2186 = vunpack.c.h.b16 %v2032
    %v2187 = vunpack.c.l.b16 %v2033
    %v2188 = vunpack.c.h.b16 %v2033
    %v2189 = vunpack.c.l.b16 %v2034
    %v2190 = vunpack.c.h.b16 %v2034
    %v2191 = vunpack.c.l.b16 %v2035
    %v2192 = vunpack.c.h.b16 %v2035
    %v2193 = vunpack.c.l.b16 %v2036
    %v2194 = vunpack.c.h.b16 %v2036
    %v2195 = vunpack.c.l.b16 %v2037
    %v2196 = vunpack.c.h.b16 %v2037
    %v2197 = vunpack.c.l.b16 %v2038
    %v2198 = vunpack.c.h.b16 %v2038
    %v2199 = vunpack.c.l.b16 %v2039
    %v2200 = vunpack.c.h.b16 %v2039
    %v2201 = vunpack.c.l.b16 %v2040
    %v2202 = vunpack.c.h.b16 %v2040
    %v2203 = vunpack.c.l.b16 %v2041
    %v2204 = vunpack.c.h.b16 %v2041
    %v2205 = vunpack.c.l.b16 %v2042
    %v2206 = vunpack.c.h.b16 %v2042
    %v2207 = vunpack.c.l.b16 %v2043
    %v2208 = vunpack.c.h.b16 %v2043
    %v2209 = vunpack.c.l.b16 %v2044
    %v2210 = vunpack.c.h.b16 %v2044
    %v2211 = vunpack.c.l.b16 %v2045
    %v2212 = vunpack.c.h.b16 %v2045
    %v2213 = vunpack.c.l.b16 %v2046
    %v2214 = vunpack.c.h.b16 %v2046
    %v2215 = vunpack.c.l.b16 %v2047
    %v2216 = vunpack.c.h.b16 %v2047
    %v2217 = vunpack.c.l.b16 %v2048
    %v2218 = vunpack.c.h.b16 %v2048
    %v2219 = vunpack.c.l.b16 %v2049
    %v2220 = vunpack.c.h.b16 %v2049
    %v2221 = vunpack.c.l.b16 %v2050
    %v2222 = vunpack.c.h.b16 %v2050
    %v2223 = vunpack.c.l.b16 %v2051
    %v2224 = vunpack.c.h.b16 %v2051
    %v2225 = vunpack.c.l.b16 %v2052
    %v2226 = vunpack.c.h.b16 %v2052
    %v2227 = vunpack.c.l.b16 %v2053
    %v2228 = vunpack.c.h.b16 %v2053
    %v2229 = vunpack.c.l.b16 %v2054
    %v2230 = vunpack.c.h.b16 %v2054
    %v2231 = vunpack.c.l.b16 %v2055
    %v2232 = vunpack.c.h.b16 %v2055
    %v2233 = vunpack.c.l.b16 %v2056
    %v2234 = vunpack.c.h.b16 %v2056
    %v2235 = vunpack.c.l.b16 %v2057
    %v2236 = vunpack.c.h.b16 %v2057
    %v2237 = vunpack.c.l.b16 %v2058
    %v2238 = vunpack.c.h.b16 %v2058
    %v2239 = vunpack.c.l.b16 %v2059
    %v2240 = vunpack.c.h.b16 %v2059
    %v2241 = vunpack.c.l.b16 %v2060
    %v2242 = vunpack.c.h.b16 %v2060
    %v2243 = vunpack.c.l.b16 %v2061
    %v2244 = vunpack.c.h.b16 %v2061
    %v2245 = vunpack.c.l.b16 %v2062
    %v2246 = vunpack.c.h.b16 %v2062
    %v2247 = vunpack.c.l.b16 %v2063
    %v2248 = vunpack.c.h.b16 %v2063
    %v2249 = vunpack.c.l.b16 %v2064
    %v2250 = vunpack.c.h.b16 %v2064
    %v2251 = vunpack.c.l.b16 %v2065
    %v2252 = vunpack.c.h.b16 %v2065
    %v2253 = vunpack.c.l.b16 %v2066
    %v2254 = vunpack.c.h.b16 %v2066
    %v2255 = vunpack.c.l.b16 %v2067
    %v2256 = vunpack.c.h.b16 %v2067
    %v2257 = vunpack.c.l.b16 %v2068
    %v2258 = vunpack.c.h.b16 %v2068
    %v2259 = vunpack.c.l.b16 %v2069
    %v2260 = vunpack.c.h.b16 %v2069
    %v2261 = vunpack.c.l.b16 %v2070
    %v2262 = vunpack.c.h.b16 %v2070
    %v2263 = vunpack.c.l.b16 %v2071
    %v2264 = vunpack.c.h.b16 %v2071
    %v2265 = vunpack.c.l.b16 %v2072
    %v2266 = vunpack.c.h.b16 %v2072
    %v2267 = vunpack.c.l.b16 %v2073
    %v2268 = vunpack.c.h.b16 %v2073
    %v2269 = vunpack.c.l.b16 %v2074
    %v2270 = vunpack.c.h.b16 %v2074
    %v2271 = vunpack.c.l.b16 %v2075
    %v2272 = vunpack.c.h.b16 %v2075
    %v2273 = vunpack.c.l.b16 %v2076
    %v2274 = vunpack.c.h.b16 %v2076
    %v2275 = vunpack.c.l.b16 %v2077
    %v2276 = vunpack.c.h.b16 %v2077
    %v2277 = vunpack.c.l.b16 %v2078
    %v2278 = vunpack.c.h.b16 %v2078
    %v2279 = vunpack.c.l.b16 %v2079
    %v2280 = vunpack.c.h.b16 %v2079
    %v2281 = vunpack.c.l.b16 %v2080
    %v2282 = vunpack.c.h.b16 %v2080
    %v2283 = vunpack.c.l.b16 %v2081
    %v2284 = vunpack.c.h.b16 %v2081
    %v2285 = vunpack.c.l.b16 %v2082
    %v2286 = vunpack.c.h.b16 %v2082
    %v2287 = vpack.c.b16 %v2161, %v2159
    %v2288 = vpack.c.b16 %v2162, %v2160
    %v2289 = vpack.c.b16 %v2165, %v2163
    %v2290 = vpack.c.b16 %v2166, %v2164
    %v2291 = vpack.c.b16 %v2169, %v2167
    %v2292 = vpack.c.b16 %v2170, %v2168
    %v2293 = vpack.c.b16 %v2173, %v2171
    %v2294 = vpack.c.b16 %v2174, %v2172
    %v2295 = vpack.c.b16 %v2177, %v2175
    %v2296 = vpack.c.b16 %v2178, %v2176
    %v2297 = vpack.c.b16 %v2181, %v2179
    %v2298 = vpack.c.b16 %v2182, %v2180
    %v2299 = vpack.c.b16 %v2185, %v2183
    %v2300 = vpack.c.b16 %v2186, %v2184
    %v2301 = vpack.c.b16 %v2189, %v2187
    %v2302 = vpack.c.b16 %v2190, %v2188
    %v2303 = vpack.c.b16 %v2193, %v2191
    %v2304 = vpack.c.b16 %v2194, %v2192
    %v2305 = vpack.c.b16 %v2197, %v2195
    %v2306 = vpack.c.b16 %v2198, %v2196
    %v2307 = vpack.c.b16 %v2201, %v2199
    %v2308 = vpack.c.b16 %v2202, %v2200
    %v2309 = vpack.c.b16 %v2205, %v2203
    %v2310 = vpack.c.b16 %v2206, %v2204
    %v2311 = vpack.c.b16 %v2209, %v2207
    %v2312 = vpack.c.b16 %v2210, %v2208
    %v2313 = vpack.c.b16 %v2213, %v2211
    %v2314 = vpack.c.b16 %v2214, %v2212
    %v2315 = vpack.c.b16 %v2217, %v2215
    %v2316 = vpack.c.b16 %v2218, %v2216
    %v2317 = vpack.c.b16 %v2221, %v2219
    %v2318 = vpack.c.b16 %v2222, %v2220
    %v2319 = vpack.c.b16 %v2225, %v2223
    %v2320 = vpack.c.b16 %v2226, %v2224
    %v2321 = vpack.c.b16 %v2229, %v2227
    %v2322 = vpack.c.b16 %v2230, %v2228
    %v2323 = vpack.c.b16 %v2233, %v2231
    %v2324 = vpack.c.b16 %v2234, %v2232
    %v2325 = vpack.c.b16 %v2237, %v2235
    %v2326 = vpack.c.b16 %v2238, %v2236
    %v2327 = vpack.c.b16 %v2241, %v2239
    %v2328 = vpack.c.b16 %v2242, %v2240
    %v2329 = vpack.c.b16 %v2245, %v2243
    %v2330 = vpack.c.b16 %v2246, %v2244
    %v2331 = vpack.c.b16 %v2249, %v2247
    %v2332 = vpack.c.b16 %v2250, %v2248
    %v2333 = vpack.c.b16 %v2253, %v2251
    %v2334 = vpack.c.b16 %v2254, %v2252
    %v2335 = vpack.c.b16 %v2257, %v2255
    %v2336 = vpack.c.b16 %v2258, %v2256
    %v2337 = vpack.c.b16 %v2261, %v2259
    %v2338 = vpack.c.b16 %v2262, %v2260
    %v2339 = vpack.c.b16 %v2265, %v2263
    %v2340 = vpack.c.b16 %v2266, %v2264
    %v2341 = vpack.c.b16 %v2269, %v2267
    %v2342 = vpack.c.b16 %v2270, %v2268
    %v2343 = vpack.c.b16 %v2273, %v2271
    %v2344 = vpack.c.b16 %v2274, %v2272
    %v2345 = vpack.c.b16 %v2277, %v2275
    %v2346 = vpack.c.b16 %v2278, %v2276
    %v2347 = vpack.c.b16 %v2281, %v2279
    %v2348 = vpack.c.b16 %v2282, %v2280
    %v2349 = vpack.c.b16 %v2285, %v2283
    %v2350 = vpack.c.b16 %v2286, %v2284
    %2415 = vmatprep.subr.bf16.mxu0 %v2288
    %2416 = vmatpush1.bf16.msra.mxu0 %v2287
    %2417 = vmatprep.subr.bf16.mxu0 %v2290
    %2418 = vmatpush1.bf16.msra.mxu0 %v2289
    %2419 = vmatprep.subr.bf16.mxu0 %v2292
    %2420 = vmatpush1.bf16.msra.mxu0 %v2291
    %2421 = vmatprep.subr.bf16.mxu0 %v2294
    %2422 = vmatpush1.bf16.msra.mxu0 %v2293
    %2423 = vmatprep.subr.bf16.mxu0 %v2296
    %2424 = vmatpush1.bf16.msra.mxu0 %v2295
    %2425 = vmatprep.subr.bf16.mxu0 %v2298
    %2426 = vmatpush1.bf16.msra.mxu0 %v2297
    %2427 = vmatprep.subr.bf16.mxu0 %v2300
    %2428 = vmatpush1.bf16.msra.mxu0 %v2299
    %2429 = vmatprep.subr.bf16.mxu0 %v2302
    %2430 = vmatpush1.bf16.msra.mxu0 %v2301
    %2431 = vmatprep.subr.bf16.mxu0 %v2304
    %2432 = vmatpush1.bf16.msra.mxu0 %v2303
    %2433 = vmatprep.subr.bf16.mxu0 %v2306
    %2434 = vmatpush1.bf16.msra.mxu0 %v2305
    %2435 = vmatprep.subr.bf16.mxu0 %v2308
    %2436 = vmatpush1.bf16.msra.mxu0 %v2307
    %2437 = vmatprep.subr.bf16.mxu0 %v2310
    %2438 = vmatpush1.bf16.msra.mxu0 %v2309
    %2439 = vmatprep.subr.bf16.mxu0 %v2312
    %2440 = vmatpush1.bf16.msra.mxu0 %v2311
    %2441 = vmatprep.subr.bf16.mxu0 %v2314
    %2442 = vmatpush1.bf16.msra.mxu0 %v2313
    %2443 = vmatprep.subr.bf16.mxu0 %v2316
    %2444 = vmatpush1.bf16.msra.mxu0 %v2315
    %2445 = vmatprep.subr.bf16.mxu0 %v2318
    %2446 = vmatpush1.bf16.msra.mxu0 %v2317
    %2447 = vmatprep.mubr.bf16.mxu0 %v2016
    %2448 = vmatmul.mubr.bf16.gmra.mrb[0].mxu0 %v2015
    %v2449 = vpop.f32.mrb[0].mxu0
    %v2450 = vadd.f32 %v2088, %v2449
    %v2451 = vpop.f32.mrb[0].mxu0
    %v2452 = vadd.f32 %v2092, %v2451
    %v2453 = vpop.f32.mrb[0].mxu0
    %v2454 = vpop.f32.mrb[0].mxu0
    %2455 = vdwg.mxu0
    %2456 = vmatprep.subr.bf16.mxu0 %v2320
    %2457 = vmatpush1.bf16.msra.mxu0 %v2319
    %2458 = vmatprep.subr.bf16.mxu0 %v2322
    %2459 = vmatpush1.bf16.msra.mxu0 %v2321
    %2460 = vmatprep.subr.bf16.mxu0 %v2324
    %2461 = vmatpush1.bf16.msra.mxu0 %v2323
    %2462 = vmatprep.subr.bf16.mxu0 %v2326
    %2463 = vmatpush1.bf16.msra.mxu0 %v2325
    %2464 = vmatprep.subr.bf16.mxu0 %v2328
    %2465 = vmatpush1.bf16.msra.mxu0 %v2327
    %2466 = vmatprep.subr.bf16.mxu0 %v2330
    %2467 = vmatpush1.bf16.msra.mxu0 %v2329
    %2468 = vmatprep.subr.bf16.mxu0 %v2332
    %2469 = vmatpush1.bf16.msra.mxu0 %v2331
    %2470 = vmatprep.subr.bf16.mxu0 %v2334
    %2471 = vmatpush1.bf16.msra.mxu0 %v2333
    %2472 = vmatprep.subr.bf16.mxu0 %v2336
    %2473 = vmatpush1.bf16.msra.mxu0 %v2335
    %2474 = vmatprep.subr.bf16.mxu0 %v2338
    %2475 = vmatpush1.bf16.msra.mxu0 %v2337
    %2476 = vmatprep.subr.bf16.mxu0 %v2340
    %2477 = vmatpush1.bf16.msra.mxu0 %v2339
    %2478 = vmatprep.subr.bf16.mxu0 %v2342
    %2479 = vmatpush1.bf16.msra.mxu0 %v2341
    %2480 = vmatprep.subr.bf16.mxu0 %v2344
    %2481 = vmatpush1.bf16.msra.mxu0 %v2343
    %2482 = vmatprep.subr.bf16.mxu0 %v2346
    %2483 = vmatpush1.bf16.msra.mxu0 %v2345
    %2484 = vmatprep.subr.bf16.mxu0 %v2348
    %2485 = vmatpush1.bf16.msra.mxu0 %v2347
    %2486 = vmatprep.subr.bf16.mxu0 %v2350
    %2487 = vmatpush1.bf16.msra.mxu0 %v2349
    %2488 = vmatprep.mubr.bf16.mxu0 %v2018
    %2489 = vmatmul.mubr.bf16.gmra.mrb[0].mxu0 %v2017
    %v2490 = vpop.f32.mrb[0].mxu0
    %v2491 = vadd.f32 %v2450, %v2490
    %v2492 = vpop.f32.mrb[0].mxu0
    %v2493 = vadd.f32 %v2452, %v2492
    %v2494 = vpop.f32.mrb[0].mxu0
    %v2495 = vpop.f32.mrb[0].mxu0
    %2496 = vdwg.mxu0
    %v2497 = vpack.c.bf16 %v2491, %v2491
    %v2498 = vpack.c.bf16 %v2493, %v2493
    %v2501 = vcombine.low %v2497, %v2498
    %v2503 = vunpack.c.l.s4 1966171168
    %v2504 = vunpack.c.0.s8 %v2503
    %v2505 = vlaneseq
    %v2506 = vshrl.u32 %v2505, 7
    %v2507 = vsub.s32 %v2504, %v2506
    %v2508 = vrot.slane %v2501, %v2507
    %v2509 = vcombine.high %v2508, %v2508
    %v2511 = vunpack.c.l.s4 1966171168
    %v2512 = vunpack.c.0.s8 %v2511
    %v2513 = vlaneseq
    %v2514 = vshrl.u32 %v2513, 7
    %v2515 = vsub.s32 %v2512, %v2514
    %v2516 = vrot.slane %v2508, %v2515
    %v2518 = vunpack.c.l.s4 1966171168
    %v2519 = vunpack.c.0.s8 %v2518
    %v2520 = vlaneseq
    %v2521 = vshrl.u32 %v2520, 7
    %v2522 = vsub.s32 %v2519, %v2521
    %v2523 = vrot.slane %v2509, %v2522
    %v2524 = vcombine.high %v2516, %v2516
    %v2525 = vcombine.high %v2523, %v2523
    %2530 = vst [vmem:[#allocation5] sm:$0x3] %v2516
    %2531 = vst [vmem:[#allocation5 + $0x2] sm:$0x3] %v2523
    %2532 = vst [vmem:[#allocation5 + $0x4] sm:$0x3] %v2524
    %2533 = vst [vmem:[#allocation5 + $0x6] sm:$0x3] %v2525
    // Predicated region
    $region26: #{resnet_fc.1} parent=1 // pred_check
      _
    $region27: #{resnet_fc.1} parent=1 // pred_check_branch
      %2535 = sbr.rel (0) target = $region29
    $region28: #{resnet_fc.1} parent=1 // pred_region
      %s2537 = ssub.s32 128, 32
      %2538 = vsyncadd [#allocation4], %s2537
      %s2539 = sshll.u32 [#allocation5], 4
      %s2540 = int_to_ptr.vmem [resolvable:$true] %s2539
      %2545 = dma.vmem_to_hbm [thread:$0]  %s2540, 32, %s5, [#allocation4], 32, 32, 2
    $region29: #{resnet_fc.1} parent=1 // pred_fallthru
      _
    // Predicated region
    $region30: #{resnet_fc.1} parent=1 // pred_check
      _
    $region31: #{resnet_fc.1} parent=1 // pred_check_branch
      %2547 = sbr.rel (0) target = $region33
    $region32: #{resnet_fc.1} parent=1 // pred_region
      %2548 = dma.done [#allocation4], 128
    $region33: #{resnet_fc.1} parent=1 // pred_fallthru
      _
    %2549 = vsyncpa [#allocation3], 1
    %2550 = vsyncpa [#allocation4], 1

</llo_original>
